<compile_context>
chip_gen: v6e
topology: v6e:2x2x1
jax: 0.10.0
libtpu: 0.0.40
codegen_flags: <defaults>
</compile_context>

<pallas_src>
import math

import jax
import jax.numpy as jnp
from jax.experimental import pallas as pl
from jax.experimental.pallas import tpu as pltpu


# ----------------------------------------------------------------------------
# Fused kernel: embedding matmul -> e_layers LSTM -> seq Linear
# Layout inside the kernel: time-major flattened 2D, row index = t * B + b.
# ----------------------------------------------------------------------------
def _fused_kernel(*refs):
    feat_ref, pe_ref, we_ref, wseq_ref, bseq_ref = refs[:5]
    out_ref = refs[-1]
    lstm_refs = refs[5:-1]
    n_layers = len(lstm_refs) // 3

    B, P, H = out_ref.shape
    LB = feat_ref.shape[0]
    L = LB // B

    # ---- DataEmbedding: circular conv + temporal linear as ONE matmul, + PE.
    #      feat rows are [x_{t-1}, x_t, x_{t+1}, mark_t] (time-major).
    seq = (jnp.dot(feat_ref[...], we_ref[...],
                   preferred_element_type=jnp.float32)
           + pe_ref[...])                                   # (L*B, D)

    # ---- LSTM stack: batched over B, input projection hoisted, unrolled.
    hs = None
    for layer in range(n_layers):
        wih = lstm_refs[3 * layer][...]                     # (Din, 4H)
        whh = lstm_refs[3 * layer + 1][...]                 # (H,   4H)
        bias = lstm_refs[3 * layer + 2][...]                # (1,   4H)

        # hoisted input-to-hidden projection for all timesteps at once
        gx = (jnp.dot(seq, wih, preferred_element_type=jnp.float32)
              + bias)                                       # (L*B, 4H)

        h = jnp.zeros((B, H), jnp.float32)
        c = jnp.zeros((B, H), jnp.float32)
        hs = []
        for t in range(L):                                  # static -> unrolled
            g = gx[t * B:(t + 1) * B, :] + jnp.dot(
                h, whh, preferred_element_type=jnp.float32)  # (B, 4H)
            i = jax.nn.sigmoid(g[:, 0:H])                    # PyTorch order i,f,g,o
            f = jax.nn.sigmoid(g[:, H:2 * H])
            gg = jnp.tanh(g[:, 2 * H:3 * H])
            o = jax.nn.sigmoid(g[:, 3 * H:4 * H])
            c = f * c + i * gg
            h = o * jnp.tanh(c)
            hs.append(h)

        if layer + 1 < n_layers:
            seq = jnp.concatenate(hs, axis=0)               # (L*B, H) time-major

    # ---- seq Linear over the time axis (permute -> Linear -> permute):
    #      out[b, p, h] = sum_t Wseq[p, t] * h_t[b, h] + bseq[p]
    wseq = wseq_ref[...]                                    # (P, L)
    bseq = bseq_ref[...]                                    # (P, 1)
    for b in range(B):
        seq_b = jnp.concatenate([h_t[b:b + 1, :] for h_t in hs], axis=0)  # (L, H)
        out_ref[b] = (jnp.dot(wseq, seq_b, preferred_element_type=jnp.float32)
                      + bseq)


def fused_forward(feat2d, pe2d, w_embed, w_seq, b_seq, lstm_params, B, P, H):
    LB, F = feat2d.shape
    D = w_embed.shape[1]
    L = LB // B

    inputs = [feat2d, pe2d, w_embed, w_seq, b_seq]
    in_specs = [
        pl.BlockSpec((LB, F), lambda i: (0, 0)),
        pl.BlockSpec((LB, D), lambda i: (0, 0)),
        pl.BlockSpec((F, D), lambda i: (0, 0)),
        pl.BlockSpec((P, L), lambda i: (0, 0)),
        pl.BlockSpec((P, 1), lambda i: (0, 0)),
    ]
    for lp in lstm_params:
        for name in ("w_ih_t", "w_hh_t", "bias"):
            arr = lp[name]
            inputs.append(arr)
            in_specs.append(pl.BlockSpec(arr.shape, lambda i: (0, 0)))

    return pl.pallas_call(
        _fused_kernel,
        out_shape=jax.ShapeDtypeStruct((B, P, H), jnp.float32),
        grid=(1,),
        in_specs=in_specs,
        out_specs=pl.BlockSpec((B, P, H), lambda i: (0, 0, 0)),
        compiler_params=pltpu.CompilerParams(
            dimension_semantics=("arbitrary",)),
    )(*inputs)


# ----------------------------------------------------------------------------
# Parameter construction (deterministic, PyTorch-like uniform init).
# Kernel-ready forms (transposes, stacked conv weight, summed biases) are built
# ONCE here instead of on every forward call.
# ----------------------------------------------------------------------------
def _uniform(key, shape, bound):
    return jax.random.uniform(key, shape, jnp.float32, -bound, bound)


def make_positional_embedding(seq_len, d_model):
    position = jnp.arange(seq_len, dtype=jnp.float32)[:, None]
    div_term = jnp.exp(jnp.arange(0, d_model, 2, dtype=jnp.float32)
                       * (-math.log(10000.0) / d_model))
    pe = jnp.zeros((seq_len, d_model), jnp.float32)
    pe = pe.at[:, 0::2].set(jnp.sin(position * div_term))
    pe = pe.at[:, 1::2].set(jnp.cos(position * div_term))
    return pe


def init_params(key, enc_in, mark_dim, d_model, c_out, e_layers,
                seq_len, pred_len):
    keys = jax.random.split(key, 4 + 4 * e_layers)

    # TokenEmbedding conv1d weight (d_model, enc_in, 3), no bias
    w_conv = _uniform(keys[0], (d_model, enc_in, 3), 1.0 / math.sqrt(enc_in * 3))
    # TimeFeatureEmbedding linear (d_model, mark_dim), no bias
    w_mark = _uniform(keys[1], (d_model, mark_dim), 1.0 / math.sqrt(mark_dim))
    # stacked embedding weight: [W_{k=0}; W_{k=1}; W_{k=2}; W_mark]  (3*Cin+Cm, D)
    w_embed = jnp.concatenate(
        [jnp.transpose(w_conv[:, :, 0]),
         jnp.transpose(w_conv[:, :, 1]),
         jnp.transpose(w_conv[:, :, 2]),
         jnp.transpose(w_mark)], axis=0)

    lstm = []
    k_lstm = 1.0 / math.sqrt(c_out)
    for layer in range(e_layers):
        din = d_model if layer == 0 else c_out
        kk = keys[2 + 4 * layer: 2 + 4 * (layer + 1)]
        w_ih = _uniform(kk[0], (4 * c_out, din), k_lstm)
        w_hh = _uniform(kk[1], (4 * c_out, c_out), k_lstm)
        b_ih = _uniform(kk[2], (4 * c_out,), k_lstm)
        b_hh = _uniform(kk[3], (4 * c_out,), k_lstm)
        lstm.append({
            "w_ih_t": jnp.transpose(w_ih),                     # (Din, 4H)
            "w_hh_t": jnp.transpose(w_hh),                     # (H,   4H)
            "bias": (b_ih + b_hh).reshape(1, 4 * c_out),       # (1,   4H)
        })

    k_seq = 1.0 / math.sqrt(seq_len)
    w_seq = _uniform(keys[-2], (pred_len, seq_len), k_seq)     # (P, L)
    b_seq = _uniform(keys[-1], (pred_len,), k_seq).reshape(pred_len, 1)

    return {
        "pe": make_positional_embedding(seq_len, d_model),     # (L, D)
        "w_embed": w_embed,
        "lstm": lstm,
        "w_seq": w_seq,
        "b_seq": b_seq,
    }


# ----------------------------------------------------------------------------
# Full model forward (x_dec / x_mark_dec unused, matching the torch module).
# The tiny time-major / circular-shift input prep is layout plumbing done in
# XLA (fuses to one small op); all compute runs in the fused Pallas kernel.
# ----------------------------------------------------------------------------
def model_forward(params, x_enc, x_mark_enc, x_dec=None, x_mark_dec=None):
    B, L, _ = x_enc.shape
    x_tm = jnp.transpose(x_enc, (1, 0, 2))                     # (L, B, Cin)
    m_tm = jnp.transpose(x_mark_enc, (1, 0, 2))                # (L, B, Cm)
    x_prev = jnp.roll(x_tm, 1, axis=0)                         # circular pad
    x_next = jnp.roll(x_tm, -1, axis=0)
    feat = jnp.concatenate([x_prev, x_tm, x_next, m_tm], axis=-1)  # (L, B, F)
    feat2d = feat.reshape(L * B, feat.shape[-1])               # row = t*B + b
    pe2d = jnp.repeat(params["pe"], B, axis=0)                 # (L*B, D)

    P = params["w_seq"].shape[0]
    H = params["lstm"][0]["w_hh_t"].shape[0]
    return fused_forward(feat2d, pe2d, params["w_embed"], params["w_seq"],
                         params["b_seq"], params["lstm"], B, P, H)


if __name__ == "__main__":
    # small config consistent with the module
    B, seq_len, pred_len = 2, 8, 8
    enc_in, mark_dim = 4, 4          # freq='h' -> 4 time features
    d_model, c_out, e_layers = 32, 16, 2

    root = jax.random.PRNGKey(0)
    k_par, k_x, k_m, k_xd, k_md = jax.random.split(root, 5)

    params = init_params(k_par, enc_in, mark_dim, d_model, c_out, e_layers,
                         seq_len, pred_len)

    x_enc = jax.random.normal(k_x, (B, seq_len, enc_in), jnp.float32)
    x_mark_enc = jax.random.normal(k_m, (B, seq_len, mark_dim), jnp.float32)
    x_dec = jax.random.normal(k_xd, (B, seq_len, enc_in), jnp.float32)
    x_mark_dec = jax.random.normal(k_md, (B, seq_len, mark_dim), jnp.float32)

    fwd = jax.jit(model_forward)
    out = fwd(params, x_enc, x_mark_enc, x_dec, x_mark_dec)
    out = jax.block_until_ready(out)
    assert out.shape == (B, pred_len, c_out), out.shape
    assert jnp.all(jnp.isfinite(out))
    print("KERNEL_OK")
</pallas_src>

<mosaic_0001>
module attributes {stable_mosaic.version = 11 : i64} {
  func.func @_fused_kernel(%arg0: i32, %arg1: memref<16x16xf32, #tpu.memory_space<vmem>>, %arg2: memref<16x32xf32, #tpu.memory_space<vmem>>, %arg3: memref<16x32xf32, #tpu.memory_space<vmem>>, %arg4: memref<8x8xf32, #tpu.memory_space<vmem>>, %arg5: memref<8x1xf32, #tpu.memory_space<vmem>>, %arg6: memref<32x64xf32, #tpu.memory_space<vmem>>, %arg7: memref<16x64xf32, #tpu.memory_space<vmem>>, %arg8: memref<1x64xf32, #tpu.memory_space<vmem>>, %arg9: memref<16x64xf32, #tpu.memory_space<vmem>>, %arg10: memref<16x64xf32, #tpu.memory_space<vmem>>, %arg11: memref<1x64xf32, #tpu.memory_space<vmem>>, %arg12: memref<2x8x16xf32, #tpu.memory_space<vmem>>) attributes {dimension_semantics = [#tpu.dimension_semantics<arbitrary>], iteration_bounds = array<i64: 1>, scalar_prefetch = 0 : i64, scratch_operands = 0 : i64, tpu.core_type = #tpu.core_type<tc>, window_params = [{pipeline_mode = #tpu.pipeline_mode<synchronous>, transform_indices = @transform_0, window_bounds = array<i64: 16, 16>}, {pipeline_mode = #tpu.pipeline_mode<synchronous>, transform_indices = @transform_1, window_bounds = array<i64: 16, 32>}, {pipeline_mode = #tpu.pipeline_mode<synchronous>, transform_indices = @transform_2, window_bounds = array<i64: 16, 32>}, {pipeline_mode = #tpu.pipeline_mode<synchronous>, transform_indices = @transform_3, window_bounds = array<i64: 8, 8>}, {pipeline_mode = #tpu.pipeline_mode<synchronous>, transform_indices = @transform_4, window_bounds = array<i64: 8, 1>}, {pipeline_mode = #tpu.pipeline_mode<synchronous>, transform_indices = @transform_5, window_bounds = array<i64: 32, 64>}, {pipeline_mode = #tpu.pipeline_mode<synchronous>, transform_indices = @transform_6, window_bounds = array<i64: 16, 64>}, {pipeline_mode = #tpu.pipeline_mode<synchronous>, transform_indices = @transform_7, window_bounds = array<i64: 1, 64>}, {pipeline_mode = #tpu.pipeline_mode<synchronous>, transform_indices = @transform_8, window_bounds = array<i64: 16, 64>}, {pipeline_mode = #tpu.pipeline_mode<synchronous>, transform_indices = @transform_9, window_bounds = array<i64: 16, 64>}, {pipeline_mode = #tpu.pipeline_mode<synchronous>, transform_indices = @transform_10, window_bounds = array<i64: 1, 64>}, {pipeline_mode = #tpu.pipeline_mode<synchronous>, transform_indices = @transform_11, window_bounds = array<i64: 2, 8, 16>}]} {
    %c0 = arith.constant 0 : index
    %c0_0 = arith.constant 0 : index
    %0 = vector.load %arg1[%c0, %c0_0] : memref<16x16xf32, #tpu.memory_space<vmem>>, vector<16x16xf32>
    %c0_1 = arith.constant 0 : index
    %c0_2 = arith.constant 0 : index
    %1 = vector.load %arg3[%c0_1, %c0_2] : memref<16x32xf32, #tpu.memory_space<vmem>>, vector<16x32xf32>
    %cst = arith.constant dense<0.000000e+00> : vector<16x32xf32>
    %2 = tpu.matmul %0, %1, %cst {dimension_numbers = #tpu.dot_dimension_numbers<[1], [0], [0], [1], [0, 0, 1, 1], [], []>} : vector<16x16xf32>, vector<16x32xf32>, vector<16x32xf32> -> vector<16x32xf32>
    %c0_3 = arith.constant 0 : index
    %c0_4 = arith.constant 0 : index
    %3 = vector.load %arg2[%c0_3, %c0_4] : memref<16x32xf32, #tpu.memory_space<vmem>>, vector<16x32xf32>
    %4 = arith.addf %2, %3 : vector<16x32xf32>
    %c0_5 = arith.constant 0 : index
    %c0_6 = arith.constant 0 : index
    %5 = vector.load %arg6[%c0_5, %c0_6] : memref<32x64xf32, #tpu.memory_space<vmem>>, vector<32x64xf32>
    %c0_7 = arith.constant 0 : index
    %c0_8 = arith.constant 0 : index
    %6 = vector.load %arg7[%c0_7, %c0_8] : memref<16x64xf32, #tpu.memory_space<vmem>>, vector<16x64xf32>
    %c0_9 = arith.constant 0 : index
    %c0_10 = arith.constant 0 : index
    %7 = vector.load %arg8[%c0_9, %c0_10] : memref<1x64xf32, #tpu.memory_space<vmem>>, vector<1x64xf32>
    %cst_11 = arith.constant dense<0.000000e+00> : vector<16x64xf32>
    %8 = tpu.matmul %4, %5, %cst_11 {dimension_numbers = #tpu.dot_dimension_numbers<[1], [0], [0], [1], [0, 0, 1, 1], [], []>} : vector<16x32xf32>, vector<32x64xf32>, vector<16x64xf32> -> vector<16x64xf32>
    %9 = vector.broadcast %7 : vector<1x64xf32> to vector<16x64xf32>
    %10 = arith.addf %8, %9 : vector<16x64xf32>
    %cst_12 = arith.constant 0.000000e+00 : f32
    %11 = vector.broadcast %cst_12 : f32 to vector<2x16xf32>
    %cst_13 = arith.constant 0.000000e+00 : f32
    %12 = vector.broadcast %cst_13 : f32 to vector<2x16xf32>
    %13 = vector.extract_strided_slice %10 {offsets = [0, 0], sizes = [2, 64], strides = [1, 1]} : vector<16x64xf32> to vector<2x64xf32>
    %cst_14 = arith.constant dense<0.000000e+00> : vector<2x64xf32>
    %14 = tpu.matmul %11, %6, %cst_14 {dimension_numbers = #tpu.dot_dimension_numbers<[1], [0], [0], [1], [0, 0, 1, 1], [], []>} : vector<2x16xf32>, vector<16x64xf32>, vector<2x64xf32> -> vector<2x64xf32>
    %15 = arith.addf %13, %14 : vector<2x64xf32>
    %16 = vector.extract_strided_slice %15 {offsets = [0, 0], sizes = [2, 16], strides = [1, 1]} : vector<2x64xf32> to vector<2x16xf32>
    %17 = arith.negf %16 : vector<2x16xf32>
    %18 = math.exp %17 : vector<2x16xf32>
    %cst_15 = arith.constant 1.000000e+00 : f32
    %19 = vector.broadcast %cst_15 : f32 to vector<2x16xf32>
    %20 = arith.addf %19, %18 : vector<2x16xf32>
    %21 = arith.divf %19, %20 : vector<2x16xf32>
    %22 = vector.extract_strided_slice %15 {offsets = [0, 16], sizes = [2, 16], strides = [1, 1]} : vector<2x64xf32> to vector<2x16xf32>
    %23 = arith.negf %22 : vector<2x16xf32>
    %24 = math.exp %23 : vector<2x16xf32>
    %cst_16 = arith.constant 1.000000e+00 : f32
    %25 = vector.broadcast %cst_16 : f32 to vector<2x16xf32>
    %26 = arith.addf %25, %24 : vector<2x16xf32>
    %27 = arith.divf %25, %26 : vector<2x16xf32>
    %28 = vector.extract_strided_slice %15 {offsets = [0, 32], sizes = [2, 16], strides = [1, 1]} : vector<2x64xf32> to vector<2x16xf32>
    %29 = math.tanh %28 : vector<2x16xf32>
    %30 = vector.extract_strided_slice %15 {offsets = [0, 48], sizes = [2, 16], strides = [1, 1]} : vector<2x64xf32> to vector<2x16xf32>
    %31 = arith.negf %30 : vector<2x16xf32>
    %32 = math.exp %31 : vector<2x16xf32>
    %cst_17 = arith.constant 1.000000e+00 : f32
    %33 = vector.broadcast %cst_17 : f32 to vector<2x16xf32>
    %34 = arith.addf %33, %32 : vector<2x16xf32>
    %35 = arith.divf %33, %34 : vector<2x16xf32>
    %36 = arith.mulf %27, %12 : vector<2x16xf32>
    %37 = arith.mulf %21, %29 : vector<2x16xf32>
    %38 = arith.addf %36, %37 : vector<2x16xf32>
    %39 = math.tanh %38 : vector<2x16xf32>
    %40 = arith.mulf %35, %39 : vector<2x16xf32>
    %41 = vector.extract_strided_slice %10 {offsets = [2, 0], sizes = [2, 64], strides = [1, 1]} : vector<16x64xf32> to vector<2x64xf32>
    %cst_18 = arith.constant dense<0.000000e+00> : vector<2x64xf32>
    %42 = tpu.matmul %40, %6, %cst_18 {dimension_numbers = #tpu.dot_dimension_numbers<[1], [0], [0], [1], [0, 0, 1, 1], [], []>} : vector<2x16xf32>, vector<16x64xf32>, vector<2x64xf32> -> vector<2x64xf32>
    %43 = arith.addf %41, %42 : vector<2x64xf32>
    %44 = vector.extract_strided_slice %43 {offsets = [0, 0], sizes = [2, 16], strides = [1, 1]} : vector<2x64xf32> to vector<2x16xf32>
    %45 = arith.negf %44 : vector<2x16xf32>
    %46 = math.exp %45 : vector<2x16xf32>
    %cst_19 = arith.constant 1.000000e+00 : f32
    %47 = vector.broadcast %cst_19 : f32 to vector<2x16xf32>
    %48 = arith.addf %47, %46 : vector<2x16xf32>
    %49 = arith.divf %47, %48 : vector<2x16xf32>
    %50 = vector.extract_strided_slice %43 {offsets = [0, 16], sizes = [2, 16], strides = [1, 1]} : vector<2x64xf32> to vector<2x16xf32>
    %51 = arith.negf %50 : vector<2x16xf32>
    %52 = math.exp %51 : vector<2x16xf32>
    %cst_20 = arith.constant 1.000000e+00 : f32
    %53 = vector.broadcast %cst_20 : f32 to vector<2x16xf32>
    %54 = arith.addf %53, %52 : vector<2x16xf32>
    %55 = arith.divf %53, %54 : vector<2x16xf32>
    %56 = vector.extract_strided_slice %43 {offsets = [0, 32], sizes = [2, 16], strides = [1, 1]} : vector<2x64xf32> to vector<2x16xf32>
    %57 = math.tanh %56 : vector<2x16xf32>
    %58 = vector.extract_strided_slice %43 {offsets = [0, 48], sizes = [2, 16], strides = [1, 1]} : vector<2x64xf32> to vector<2x16xf32>
    %59 = arith.negf %58 : vector<2x16xf32>
    %60 = math.exp %59 : vector<2x16xf32>
    %cst_21 = arith.constant 1.000000e+00 : f32
    %61 = vector.broadcast %cst_21 : f32 to vector<2x16xf32>
    %62 = arith.addf %61, %60 : vector<2x16xf32>
    %63 = arith.divf %61, %62 : vector<2x16xf32>
    %64 = arith.mulf %55, %38 : vector<2x16xf32>
    %65 = arith.mulf %49, %57 : vector<2x16xf32>
    %66 = arith.addf %64, %65 : vector<2x16xf32>
    %67 = math.tanh %66 : vector<2x16xf32>
    %68 = arith.mulf %63, %67 : vector<2x16xf32>
    %69 = vector.extract_strided_slice %10 {offsets = [4, 0], sizes = [2, 64], strides = [1, 1]} : vector<16x64xf32> to vector<2x64xf32>
    %cst_22 = arith.constant dense<0.000000e+00> : vector<2x64xf32>
    %70 = tpu.matmul %68, %6, %cst_22 {dimension_numbers = #tpu.dot_dimension_numbers<[1], [0], [0], [1], [0, 0, 1, 1], [], []>} : vector<2x16xf32>, vector<16x64xf32>, vector<2x64xf32> -> vector<2x64xf32>
    %71 = arith.addf %69, %70 : vector<2x64xf32>
    %72 = vector.extract_strided_slice %71 {offsets = [0, 0], sizes = [2, 16], strides = [1, 1]} : vector<2x64xf32> to vector<2x16xf32>
    %73 = arith.negf %72 : vector<2x16xf32>
    %74 = math.exp %73 : vector<2x16xf32>
    %cst_23 = arith.constant 1.000000e+00 : f32
    %75 = vector.broadcast %cst_23 : f32 to vector<2x16xf32>
    %76 = arith.addf %75, %74 : vector<2x16xf32>
    %77 = arith.divf %75, %76 : vector<2x16xf32>
    %78 = vector.extract_strided_slice %71 {offsets = [0, 16], sizes = [2, 16], strides = [1, 1]} : vector<2x64xf32> to vector<2x16xf32>
    %79 = arith.negf %78 : vector<2x16xf32>
    %80 = math.exp %79 : vector<2x16xf32>
    %cst_24 = arith.constant 1.000000e+00 : f32
    %81 = vector.broadcast %cst_24 : f32 to vector<2x16xf32>
    %82 = arith.addf %81, %80 : vector<2x16xf32>
    %83 = arith.divf %81, %82 : vector<2x16xf32>
    %84 = vector.extract_strided_slice %71 {offsets = [0, 32], sizes = [2, 16], strides = [1, 1]} : vector<2x64xf32> to vector<2x16xf32>
    %85 = math.tanh %84 : vector<2x16xf32>
    %86 = vector.extract_strided_slice %71 {offsets = [0, 48], sizes = [2, 16], strides = [1, 1]} : vector<2x64xf32> to vector<2x16xf32>
    %87 = arith.negf %86 : vector<2x16xf32>
    %88 = math.exp %87 : vector<2x16xf32>
    %cst_25 = arith.constant 1.000000e+00 : f32
    %89 = vector.broadcast %cst_25 : f32 to vector<2x16xf32>
    %90 = arith.addf %89, %88 : vector<2x16xf32>
    %91 = arith.divf %89, %90 : vector<2x16xf32>
    %92 = arith.mulf %83, %66 : vector<2x16xf32>
    %93 = arith.mulf %77, %85 : vector<2x16xf32>
    %94 = arith.addf %92, %93 : vector<2x16xf32>
    %95 = math.tanh %94 : vector<2x16xf32>
    %96 = arith.mulf %91, %95 : vector<2x16xf32>
    %97 = vector.extract_strided_slice %10 {offsets = [6, 0], sizes = [2, 64], strides = [1, 1]} : vector<16x64xf32> to vector<2x64xf32>
    %cst_26 = arith.constant dense<0.000000e+00> : vector<2x64xf32>
    %98 = tpu.matmul %96, %6, %cst_26 {dimension_numbers = #tpu.dot_dimension_numbers<[1], [0], [0], [1], [0, 0, 1, 1], [], []>} : vector<2x16xf32>, vector<16x64xf32>, vector<2x64xf32> -> vector<2x64xf32>
    %99 = arith.addf %97, %98 : vector<2x64xf32>
    %100 = vector.extract_strided_slice %99 {offsets = [0, 0], sizes = [2, 16], strides = [1, 1]} : vector<2x64xf32> to vector<2x16xf32>
    %101 = arith.negf %100 : vector<2x16xf32>
    %102 = math.exp %101 : vector<2x16xf32>
    %cst_27 = arith.constant 1.000000e+00 : f32
    %103 = vector.broadcast %cst_27 : f32 to vector<2x16xf32>
    %104 = arith.addf %103, %102 : vector<2x16xf32>
    %105 = arith.divf %103, %104 : vector<2x16xf32>
    %106 = vector.extract_strided_slice %99 {offsets = [0, 16], sizes = [2, 16], strides = [1, 1]} : vector<2x64xf32> to vector<2x16xf32>
    %107 = arith.negf %106 : vector<2x16xf32>
    %108 = math.exp %107 : vector<2x16xf32>
    %cst_28 = arith.constant 1.000000e+00 : f32
    %109 = vector.broadcast %cst_28 : f32 to vector<2x16xf32>
    %110 = arith.addf %109, %108 : vector<2x16xf32>
    %111 = arith.divf %109, %110 : vector<2x16xf32>
    %112 = vector.extract_strided_slice %99 {offsets = [0, 32], sizes = [2, 16], strides = [1, 1]} : vector<2x64xf32> to vector<2x16xf32>
    %113 = math.tanh %112 : vector<2x16xf32>
    %114 = vector.extract_strided_slice %99 {offsets = [0, 48], sizes = [2, 16], strides = [1, 1]} : vector<2x64xf32> to vector<2x16xf32>
    %115 = arith.negf %114 : vector<2x16xf32>
    %116 = math.exp %115 : vector<2x16xf32>
    %cst_29 = arith.constant 1.000000e+00 : f32
    %117 = vector.broadcast %cst_29 : f32 to vector<2x16xf32>
    %118 = arith.addf %117, %116 : vector<2x16xf32>
    %119 = arith.divf %117, %118 : vector<2x16xf32>
    %120 = arith.mulf %111, %94 : vector<2x16xf32>
    %121 = arith.mulf %105, %113 : vector<2x16xf32>
    %122 = arith.addf %120, %121 : vector<2x16xf32>
    %123 = math.tanh %122 : vector<2x16xf32>
    %124 = arith.mulf %119, %123 : vector<2x16xf32>
    %125 = vector.extract_strided_slice %10 {offsets = [8, 0], sizes = [2, 64], strides = [1, 1]} : vector<16x64xf32> to vector<2x64xf32>
    %cst_30 = arith.constant dense<0.000000e+00> : vector<2x64xf32>
    %126 = tpu.matmul %124, %6, %cst_30 {dimension_numbers = #tpu.dot_dimension_numbers<[1], [0], [0], [1], [0, 0, 1, 1], [], []>} : vector<2x16xf32>, vector<16x64xf32>, vector<2x64xf32> -> vector<2x64xf32>
    %127 = arith.addf %125, %126 : vector<2x64xf32>
    %128 = vector.extract_strided_slice %127 {offsets = [0, 0], sizes = [2, 16], strides = [1, 1]} : vector<2x64xf32> to vector<2x16xf32>
    %129 = arith.negf %128 : vector<2x16xf32>
    %130 = math.exp %129 : vector<2x16xf32>
    %cst_31 = arith.constant 1.000000e+00 : f32
    %131 = vector.broadcast %cst_31 : f32 to vector<2x16xf32>
    %132 = arith.addf %131, %130 : vector<2x16xf32>
    %133 = arith.divf %131, %132 : vector<2x16xf32>
    %134 = vector.extract_strided_slice %127 {offsets = [0, 16], sizes = [2, 16], strides = [1, 1]} : vector<2x64xf32> to vector<2x16xf32>
    %135 = arith.negf %134 : vector<2x16xf32>
    %136 = math.exp %135 : vector<2x16xf32>
    %cst_32 = arith.constant 1.000000e+00 : f32
    %137 = vector.broadcast %cst_32 : f32 to vector<2x16xf32>
    %138 = arith.addf %137, %136 : vector<2x16xf32>
    %139 = arith.divf %137, %138 : vector<2x16xf32>
    %140 = vector.extract_strided_slice %127 {offsets = [0, 32], sizes = [2, 16], strides = [1, 1]} : vector<2x64xf32> to vector<2x16xf32>
    %141 = math.tanh %140 : vector<2x16xf32>
    %142 = vector.extract_strided_slice %127 {offsets = [0, 48], sizes = [2, 16], strides = [1, 1]} : vector<2x64xf32> to vector<2x16xf32>
    %143 = arith.negf %142 : vector<2x16xf32>
    %144 = math.exp %143 : vector<2x16xf32>
    %cst_33 = arith.constant 1.000000e+00 : f32
    %145 = vector.broadcast %cst_33 : f32 to vector<2x16xf32>
    %146 = arith.addf %145, %144 : vector<2x16xf32>
    %147 = arith.divf %145, %146 : vector<2x16xf32>
    %148 = arith.mulf %139, %122 : vector<2x16xf32>
    %149 = arith.mulf %133, %141 : vector<2x16xf32>
    %150 = arith.addf %148, %149 : vector<2x16xf32>
    %151 = math.tanh %150 : vector<2x16xf32>
    %152 = arith.mulf %147, %151 : vector<2x16xf32>
    %153 = vector.extract_strided_slice %10 {offsets = [10, 0], sizes = [2, 64], strides = [1, 1]} : vector<16x64xf32> to vector<2x64xf32>
    %cst_34 = arith.constant dense<0.000000e+00> : vector<2x64xf32>
    %154 = tpu.matmul %152, %6, %cst_34 {dimension_numbers = #tpu.dot_dimension_numbers<[1], [0], [0], [1], [0, 0, 1, 1], [], []>} : vector<2x16xf32>, vector<16x64xf32>, vector<2x64xf32> -> vector<2x64xf32>
    %155 = arith.addf %153, %154 : vector<2x64xf32>
    %156 = vector.extract_strided_slice %155 {offsets = [0, 0], sizes = [2, 16], strides = [1, 1]} : vector<2x64xf32> to vector<2x16xf32>
    %157 = arith.negf %156 : vector<2x16xf32>
    %158 = math.exp %157 : vector<2x16xf32>
    %cst_35 = arith.constant 1.000000e+00 : f32
    %159 = vector.broadcast %cst_35 : f32 to vector<2x16xf32>
    %160 = arith.addf %159, %158 : vector<2x16xf32>
    %161 = arith.divf %159, %160 : vector<2x16xf32>
    %162 = vector.extract_strided_slice %155 {offsets = [0, 16], sizes = [2, 16], strides = [1, 1]} : vector<2x64xf32> to vector<2x16xf32>
    %163 = arith.negf %162 : vector<2x16xf32>
    %164 = math.exp %163 : vector<2x16xf32>
    %cst_36 = arith.constant 1.000000e+00 : f32
    %165 = vector.broadcast %cst_36 : f32 to vector<2x16xf32>
    %166 = arith.addf %165, %164 : vector<2x16xf32>
    %167 = arith.divf %165, %166 : vector<2x16xf32>
    %168 = vector.extract_strided_slice %155 {offsets = [0, 32], sizes = [2, 16], strides = [1, 1]} : vector<2x64xf32> to vector<2x16xf32>
    %169 = math.tanh %168 : vector<2x16xf32>
    %170 = vector.extract_strided_slice %155 {offsets = [0, 48], sizes = [2, 16], strides = [1, 1]} : vector<2x64xf32> to vector<2x16xf32>
    %171 = arith.negf %170 : vector<2x16xf32>
    %172 = math.exp %171 : vector<2x16xf32>
    %cst_37 = arith.constant 1.000000e+00 : f32
    %173 = vector.broadcast %cst_37 : f32 to vector<2x16xf32>
    %174 = arith.addf %173, %172 : vector<2x16xf32>
    %175 = arith.divf %173, %174 : vector<2x16xf32>
    %176 = arith.mulf %167, %150 : vector<2x16xf32>
    %177 = arith.mulf %161, %169 : vector<2x16xf32>
    %178 = arith.addf %176, %177 : vector<2x16xf32>
    %179 = math.tanh %178 : vector<2x16xf32>
    %180 = arith.mulf %175, %179 : vector<2x16xf32>
    %181 = vector.extract_strided_slice %10 {offsets = [12, 0], sizes = [2, 64], strides = [1, 1]} : vector<16x64xf32> to vector<2x64xf32>
    %cst_38 = arith.constant dense<0.000000e+00> : vector<2x64xf32>
    %182 = tpu.matmul %180, %6, %cst_38 {dimension_numbers = #tpu.dot_dimension_numbers<[1], [0], [0], [1], [0, 0, 1, 1], [], []>} : vector<2x16xf32>, vector<16x64xf32>, vector<2x64xf32> -> vector<2x64xf32>
    %183 = arith.addf %181, %182 : vector<2x64xf32>
    %184 = vector.extract_strided_slice %183 {offsets = [0, 0], sizes = [2, 16], strides = [1, 1]} : vector<2x64xf32> to vector<2x16xf32>
    %185 = arith.negf %184 : vector<2x16xf32>
    %186 = math.exp %185 : vector<2x16xf32>
    %cst_39 = arith.constant 1.000000e+00 : f32
    %187 = vector.broadcast %cst_39 : f32 to vector<2x16xf32>
    %188 = arith.addf %187, %186 : vector<2x16xf32>
    %189 = arith.divf %187, %188 : vector<2x16xf32>
    %190 = vector.extract_strided_slice %183 {offsets = [0, 16], sizes = [2, 16], strides = [1, 1]} : vector<2x64xf32> to vector<2x16xf32>
    %191 = arith.negf %190 : vector<2x16xf32>
    %192 = math.exp %191 : vector<2x16xf32>
    %cst_40 = arith.constant 1.000000e+00 : f32
    %193 = vector.broadcast %cst_40 : f32 to vector<2x16xf32>
    %194 = arith.addf %193, %192 : vector<2x16xf32>
    %195 = arith.divf %193, %194 : vector<2x16xf32>
    %196 = vector.extract_strided_slice %183 {offsets = [0, 32], sizes = [2, 16], strides = [1, 1]} : vector<2x64xf32> to vector<2x16xf32>
    %197 = math.tanh %196 : vector<2x16xf32>
    %198 = vector.extract_strided_slice %183 {offsets = [0, 48], sizes = [2, 16], strides = [1, 1]} : vector<2x64xf32> to vector<2x16xf32>
    %199 = arith.negf %198 : vector<2x16xf32>
    %200 = math.exp %199 : vector<2x16xf32>
    %cst_41 = arith.constant 1.000000e+00 : f32
    %201 = vector.broadcast %cst_41 : f32 to vector<2x16xf32>
    %202 = arith.addf %201, %200 : vector<2x16xf32>
    %203 = arith.divf %201, %202 : vector<2x16xf32>
    %204 = arith.mulf %195, %178 : vector<2x16xf32>
    %205 = arith.mulf %189, %197 : vector<2x16xf32>
    %206 = arith.addf %204, %205 : vector<2x16xf32>
    %207 = math.tanh %206 : vector<2x16xf32>
    %208 = arith.mulf %203, %207 : vector<2x16xf32>
    %209 = vector.extract_strided_slice %10 {offsets = [14, 0], sizes = [2, 64], strides = [1, 1]} : vector<16x64xf32> to vector<2x64xf32>
    %cst_42 = arith.constant dense<0.000000e+00> : vector<2x64xf32>
    %210 = tpu.matmul %208, %6, %cst_42 {dimension_numbers = #tpu.dot_dimension_numbers<[1], [0], [0], [1], [0, 0, 1, 1], [], []>} : vector<2x16xf32>, vector<16x64xf32>, vector<2x64xf32> -> vector<2x64xf32>
    %211 = arith.addf %209, %210 : vector<2x64xf32>
    %212 = vector.extract_strided_slice %211 {offsets = [0, 0], sizes = [2, 16], strides = [1, 1]} : vector<2x64xf32> to vector<2x16xf32>
    %213 = arith.negf %212 : vector<2x16xf32>
    %214 = math.exp %213 : vector<2x16xf32>
    %cst_43 = arith.constant 1.000000e+00 : f32
    %215 = vector.broadcast %cst_43 : f32 to vector<2x16xf32>
    %216 = arith.addf %215, %214 : vector<2x16xf32>
    %217 = arith.divf %215, %216 : vector<2x16xf32>
    %218 = vector.extract_strided_slice %211 {offsets = [0, 16], sizes = [2, 16], strides = [1, 1]} : vector<2x64xf32> to vector<2x16xf32>
    %219 = arith.negf %218 : vector<2x16xf32>
    %220 = math.exp %219 : vector<2x16xf32>
    %cst_44 = arith.constant 1.000000e+00 : f32
    %221 = vector.broadcast %cst_44 : f32 to vector<2x16xf32>
    %222 = arith.addf %221, %220 : vector<2x16xf32>
    %223 = arith.divf %221, %222 : vector<2x16xf32>
    %224 = vector.extract_strided_slice %211 {offsets = [0, 32], sizes = [2, 16], strides = [1, 1]} : vector<2x64xf32> to vector<2x16xf32>
    %225 = math.tanh %224 : vector<2x16xf32>
    %226 = vector.extract_strided_slice %211 {offsets = [0, 48], sizes = [2, 16], strides = [1, 1]} : vector<2x64xf32> to vector<2x16xf32>
    %227 = arith.negf %226 : vector<2x16xf32>
    %228 = math.exp %227 : vector<2x16xf32>
    %cst_45 = arith.constant 1.000000e+00 : f32
    %229 = vector.broadcast %cst_45 : f32 to vector<2x16xf32>
    %230 = arith.addf %229, %228 : vector<2x16xf32>
    %231 = arith.divf %229, %230 : vector<2x16xf32>
    %232 = arith.mulf %223, %206 : vector<2x16xf32>
    %233 = arith.mulf %217, %225 : vector<2x16xf32>
    %234 = arith.addf %232, %233 : vector<2x16xf32>
    %235 = math.tanh %234 : vector<2x16xf32>
    %236 = arith.mulf %231, %235 : vector<2x16xf32>
    %237 = tpu.concatenate %40, %68, %96, %124, %152, %180, %208, %236 in 0 : vector<2x16xf32>, vector<2x16xf32>, vector<2x16xf32>, vector<2x16xf32>, vector<2x16xf32>, vector<2x16xf32>, vector<2x16xf32>, vector<2x16xf32> -> vector<16x16xf32>
    %c0_46 = arith.constant 0 : index
    %c0_47 = arith.constant 0 : index
    %238 = vector.load %arg9[%c0_46, %c0_47] : memref<16x64xf32, #tpu.memory_space<vmem>>, vector<16x64xf32>
    %c0_48 = arith.constant 0 : index
    %c0_49 = arith.constant 0 : index
    %239 = vector.load %arg10[%c0_48, %c0_49] : memref<16x64xf32, #tpu.memory_space<vmem>>, vector<16x64xf32>
    %c0_50 = arith.constant 0 : index
    %c0_51 = arith.constant 0 : index
    %240 = vector.load %arg11[%c0_50, %c0_51] : memref<1x64xf32, #tpu.memory_space<vmem>>, vector<1x64xf32>
    %cst_52 = arith.constant dense<0.000000e+00> : vector<16x64xf32>
    %241 = tpu.matmul %237, %238, %cst_52 {dimension_numbers = #tpu.dot_dimension_numbers<[1], [0], [0], [1], [0, 0, 1, 1], [], []>} : vector<16x16xf32>, vector<16x64xf32>, vector<16x64xf32> -> vector<16x64xf32>
    %242 = vector.broadcast %240 : vector<1x64xf32> to vector<16x64xf32>
    %243 = arith.addf %241, %242 : vector<16x64xf32>
    %cst_53 = arith.constant 0.000000e+00 : f32
    %244 = vector.broadcast %cst_53 : f32 to vector<2x16xf32>
    %cst_54 = arith.constant 0.000000e+00 : f32
    %245 = vector.broadcast %cst_54 : f32 to vector<2x16xf32>
    %246 = vector.extract_strided_slice %243 {offsets = [0, 0], sizes = [2, 64], strides = [1, 1]} : vector<16x64xf32> to vector<2x64xf32>
    %cst_55 = arith.constant dense<0.000000e+00> : vector<2x64xf32>
    %247 = tpu.matmul %244, %239, %cst_55 {dimension_numbers = #tpu.dot_dimension_numbers<[1], [0], [0], [1], [0, 0, 1, 1], [], []>} : vector<2x16xf32>, vector<16x64xf32>, vector<2x64xf32> -> vector<2x64xf32>
    %248 = arith.addf %246, %247 : vector<2x64xf32>
    %249 = vector.extract_strided_slice %248 {offsets = [0, 0], sizes = [2, 16], strides = [1, 1]} : vector<2x64xf32> to vector<2x16xf32>
    %250 = arith.negf %249 : vector<2x16xf32>
    %251 = math.exp %250 : vector<2x16xf32>
    %cst_56 = arith.constant 1.000000e+00 : f32
    %252 = vector.broadcast %cst_56 : f32 to vector<2x16xf32>
    %253 = arith.addf %252, %251 : vector<2x16xf32>
    %254 = arith.divf %252, %253 : vector<2x16xf32>
    %255 = vector.extract_strided_slice %248 {offsets = [0, 16], sizes = [2, 16], strides = [1, 1]} : vector<2x64xf32> to vector<2x16xf32>
    %256 = arith.negf %255 : vector<2x16xf32>
    %257 = math.exp %256 : vector<2x16xf32>
    %cst_57 = arith.constant 1.000000e+00 : f32
    %258 = vector.broadcast %cst_57 : f32 to vector<2x16xf32>
    %259 = arith.addf %258, %257 : vector<2x16xf32>
    %260 = arith.divf %258, %259 : vector<2x16xf32>
    %261 = vector.extract_strided_slice %248 {offsets = [0, 32], sizes = [2, 16], strides = [1, 1]} : vector<2x64xf32> to vector<2x16xf32>
    %262 = math.tanh %261 : vector<2x16xf32>
    %263 = vector.extract_strided_slice %248 {offsets = [0, 48], sizes = [2, 16], strides = [1, 1]} : vector<2x64xf32> to vector<2x16xf32>
    %264 = arith.negf %263 : vector<2x16xf32>
    %265 = math.exp %264 : vector<2x16xf32>
    %cst_58 = arith.constant 1.000000e+00 : f32
    %266 = vector.broadcast %cst_58 : f32 to vector<2x16xf32>
    %267 = arith.addf %266, %265 : vector<2x16xf32>
    %268 = arith.divf %266, %267 : vector<2x16xf32>
    %269 = arith.mulf %260, %245 : vector<2x16xf32>
    %270 = arith.mulf %254, %262 : vector<2x16xf32>
    %271 = arith.addf %269, %270 : vector<2x16xf32>
    %272 = math.tanh %271 : vector<2x16xf32>
    %273 = arith.mulf %268, %272 : vector<2x16xf32>
    %274 = vector.extract_strided_slice %243 {offsets = [2, 0], sizes = [2, 64], strides = [1, 1]} : vector<16x64xf32> to vector<2x64xf32>
    %cst_59 = arith.constant dense<0.000000e+00> : vector<2x64xf32>
    %275 = tpu.matmul %273, %239, %cst_59 {dimension_numbers = #tpu.dot_dimension_numbers<[1], [0], [0], [1], [0, 0, 1, 1], [], []>} : vector<2x16xf32>, vector<16x64xf32>, vector<2x64xf32> -> vector<2x64xf32>
    %276 = arith.addf %274, %275 : vector<2x64xf32>
    %277 = vector.extract_strided_slice %276 {offsets = [0, 0], sizes = [2, 16], strides = [1, 1]} : vector<2x64xf32> to vector<2x16xf32>
    %278 = arith.negf %277 : vector<2x16xf32>
    %279 = math.exp %278 : vector<2x16xf32>
    %cst_60 = arith.constant 1.000000e+00 : f32
    %280 = vector.broadcast %cst_60 : f32 to vector<2x16xf32>
    %281 = arith.addf %280, %279 : vector<2x16xf32>
    %282 = arith.divf %280, %281 : vector<2x16xf32>
    %283 = vector.extract_strided_slice %276 {offsets = [0, 16], sizes = [2, 16], strides = [1, 1]} : vector<2x64xf32> to vector<2x16xf32>
    %284 = arith.negf %283 : vector<2x16xf32>
    %285 = math.exp %284 : vector<2x16xf32>
    %cst_61 = arith.constant 1.000000e+00 : f32
    %286 = vector.broadcast %cst_61 : f32 to vector<2x16xf32>
    %287 = arith.addf %286, %285 : vector<2x16xf32>
    %288 = arith.divf %286, %287 : vector<2x16xf32>
    %289 = vector.extract_strided_slice %276 {offsets = [0, 32], sizes = [2, 16], strides = [1, 1]} : vector<2x64xf32> to vector<2x16xf32>
    %290 = math.tanh %289 : vector<2x16xf32>
    %291 = vector.extract_strided_slice %276 {offsets = [0, 48], sizes = [2, 16], strides = [1, 1]} : vector<2x64xf32> to vector<2x16xf32>
    %292 = arith.negf %291 : vector<2x16xf32>
    %293 = math.exp %292 : vector<2x16xf32>
    %cst_62 = arith.constant 1.000000e+00 : f32
    %294 = vector.broadcast %cst_62 : f32 to vector<2x16xf32>
    %295 = arith.addf %294, %293 : vector<2x16xf32>
    %296 = arith.divf %294, %295 : vector<2x16xf32>
    %297 = arith.mulf %288, %271 : vector<2x16xf32>
    %298 = arith.mulf %282, %290 : vector<2x16xf32>
    %299 = arith.addf %297, %298 : vector<2x16xf32>
    %300 = math.tanh %299 : vector<2x16xf32>
    %301 = arith.mulf %296, %300 : vector<2x16xf32>
    %302 = vector.extract_strided_slice %243 {offsets = [4, 0], sizes = [2, 64], strides = [1, 1]} : vector<16x64xf32> to vector<2x64xf32>
    %cst_63 = arith.constant dense<0.000000e+00> : vector<2x64xf32>
    %303 = tpu.matmul %301, %239, %cst_63 {dimension_numbers = #tpu.dot_dimension_numbers<[1], [0], [0], [1], [0, 0, 1, 1], [], []>} : vector<2x16xf32>, vector<16x64xf32>, vector<2x64xf32> -> vector<2x64xf32>
    %304 = arith.addf %302, %303 : vector<2x64xf32>
    %305 = vector.extract_strided_slice %304 {offsets = [0, 0], sizes = [2, 16], strides = [1, 1]} : vector<2x64xf32> to vector<2x16xf32>
    %306 = arith.negf %305 : vector<2x16xf32>
    %307 = math.exp %306 : vector<2x16xf32>
    %cst_64 = arith.constant 1.000000e+00 : f32
    %308 = vector.broadcast %cst_64 : f32 to vector<2x16xf32>
    %309 = arith.addf %308, %307 : vector<2x16xf32>
    %310 = arith.divf %308, %309 : vector<2x16xf32>
    %311 = vector.extract_strided_slice %304 {offsets = [0, 16], sizes = [2, 16], strides = [1, 1]} : vector<2x64xf32> to vector<2x16xf32>
    %312 = arith.negf %311 : vector<2x16xf32>
    %313 = math.exp %312 : vector<2x16xf32>
    %cst_65 = arith.constant 1.000000e+00 : f32
    %314 = vector.broadcast %cst_65 : f32 to vector<2x16xf32>
    %315 = arith.addf %314, %313 : vector<2x16xf32>
    %316 = arith.divf %314, %315 : vector<2x16xf32>
    %317 = vector.extract_strided_slice %304 {offsets = [0, 32], sizes = [2, 16], strides = [1, 1]} : vector<2x64xf32> to vector<2x16xf32>
    %318 = math.tanh %317 : vector<2x16xf32>
    %319 = vector.extract_strided_slice %304 {offsets = [0, 48], sizes = [2, 16], strides = [1, 1]} : vector<2x64xf32> to vector<2x16xf32>
    %320 = arith.negf %319 : vector<2x16xf32>
    %321 = math.exp %320 : vector<2x16xf32>
    %cst_66 = arith.constant 1.000000e+00 : f32
    %322 = vector.broadcast %cst_66 : f32 to vector<2x16xf32>
    %323 = arith.addf %322, %321 : vector<2x16xf32>
    %324 = arith.divf %322, %323 : vector<2x16xf32>
    %325 = arith.mulf %316, %299 : vector<2x16xf32>
    %326 = arith.mulf %310, %318 : vector<2x16xf32>
    %327 = arith.addf %325, %326 : vector<2x16xf32>
    %328 = math.tanh %327 : vector<2x16xf32>
    %329 = arith.mulf %324, %328 : vector<2x16xf32>
    %330 = vector.extract_strided_slice %243 {offsets = [6, 0], sizes = [2, 64], strides = [1, 1]} : vector<16x64xf32> to vector<2x64xf32>
    %cst_67 = arith.constant dense<0.000000e+00> : vector<2x64xf32>
    %331 = tpu.matmul %329, %239, %cst_67 {dimension_numbers = #tpu.dot_dimension_numbers<[1], [0], [0], [1], [0, 0, 1, 1], [], []>} : vector<2x16xf32>, vector<16x64xf32>, vector<2x64xf32> -> vector<2x64xf32>
    %332 = arith.addf %330, %331 : vector<2x64xf32>
    %333 = vector.extract_strided_slice %332 {offsets = [0, 0], sizes = [2, 16], strides = [1, 1]} : vector<2x64xf32> to vector<2x16xf32>
    %334 = arith.negf %333 : vector<2x16xf32>
    %335 = math.exp %334 : vector<2x16xf32>
    %cst_68 = arith.constant 1.000000e+00 : f32
    %336 = vector.broadcast %cst_68 : f32 to vector<2x16xf32>
    %337 = arith.addf %336, %335 : vector<2x16xf32>
    %338 = arith.divf %336, %337 : vector<2x16xf32>
    %339 = vector.extract_strided_slice %332 {offsets = [0, 16], sizes = [2, 16], strides = [1, 1]} : vector<2x64xf32> to vector<2x16xf32>
    %340 = arith.negf %339 : vector<2x16xf32>
    %341 = math.exp %340 : vector<2x16xf32>
    %cst_69 = arith.constant 1.000000e+00 : f32
    %342 = vector.broadcast %cst_69 : f32 to vector<2x16xf32>
    %343 = arith.addf %342, %341 : vector<2x16xf32>
    %344 = arith.divf %342, %343 : vector<2x16xf32>
    %345 = vector.extract_strided_slice %332 {offsets = [0, 32], sizes = [2, 16], strides = [1, 1]} : vector<2x64xf32> to vector<2x16xf32>
    %346 = math.tanh %345 : vector<2x16xf32>
    %347 = vector.extract_strided_slice %332 {offsets = [0, 48], sizes = [2, 16], strides = [1, 1]} : vector<2x64xf32> to vector<2x16xf32>
    %348 = arith.negf %347 : vector<2x16xf32>
    %349 = math.exp %348 : vector<2x16xf32>
    %cst_70 = arith.constant 1.000000e+00 : f32
    %350 = vector.broadcast %cst_70 : f32 to vector<2x16xf32>
    %351 = arith.addf %350, %349 : vector<2x16xf32>
    %352 = arith.divf %350, %351 : vector<2x16xf32>
    %353 = arith.mulf %344, %327 : vector<2x16xf32>
    %354 = arith.mulf %338, %346 : vector<2x16xf32>
    %355 = arith.addf %353, %354 : vector<2x16xf32>
    %356 = math.tanh %355 : vector<2x16xf32>
    %357 = arith.mulf %352, %356 : vector<2x16xf32>
    %358 = vector.extract_strided_slice %243 {offsets = [8, 0], sizes = [2, 64], strides = [1, 1]} : vector<16x64xf32> to vector<2x64xf32>
    %cst_71 = arith.constant dense<0.000000e+00> : vector<2x64xf32>
    %359 = tpu.matmul %357, %239, %cst_71 {dimension_numbers = #tpu.dot_dimension_numbers<[1], [0], [0], [1], [0, 0, 1, 1], [], []>} : vector<2x16xf32>, vector<16x64xf32>, vector<2x64xf32> -> vector<2x64xf32>
    %360 = arith.addf %358, %359 : vector<2x64xf32>
    %361 = vector.extract_strided_slice %360 {offsets = [0, 0], sizes = [2, 16], strides = [1, 1]} : vector<2x64xf32> to vector<2x16xf32>
    %362 = arith.negf %361 : vector<2x16xf32>
    %363 = math.exp %362 : vector<2x16xf32>
    %cst_72 = arith.constant 1.000000e+00 : f32
    %364 = vector.broadcast %cst_72 : f32 to vector<2x16xf32>
    %365 = arith.addf %364, %363 : vector<2x16xf32>
    %366 = arith.divf %364, %365 : vector<2x16xf32>
    %367 = vector.extract_strided_slice %360 {offsets = [0, 16], sizes = [2, 16], strides = [1, 1]} : vector<2x64xf32> to vector<2x16xf32>
    %368 = arith.negf %367 : vector<2x16xf32>
    %369 = math.exp %368 : vector<2x16xf32>
    %cst_73 = arith.constant 1.000000e+00 : f32
    %370 = vector.broadcast %cst_73 : f32 to vector<2x16xf32>
    %371 = arith.addf %370, %369 : vector<2x16xf32>
    %372 = arith.divf %370, %371 : vector<2x16xf32>
    %373 = vector.extract_strided_slice %360 {offsets = [0, 32], sizes = [2, 16], strides = [1, 1]} : vector<2x64xf32> to vector<2x16xf32>
    %374 = math.tanh %373 : vector<2x16xf32>
    %375 = vector.extract_strided_slice %360 {offsets = [0, 48], sizes = [2, 16], strides = [1, 1]} : vector<2x64xf32> to vector<2x16xf32>
    %376 = arith.negf %375 : vector<2x16xf32>
    %377 = math.exp %376 : vector<2x16xf32>
    %cst_74 = arith.constant 1.000000e+00 : f32
    %378 = vector.broadcast %cst_74 : f32 to vector<2x16xf32>
    %379 = arith.addf %378, %377 : vector<2x16xf32>
    %380 = arith.divf %378, %379 : vector<2x16xf32>
    %381 = arith.mulf %372, %355 : vector<2x16xf32>
    %382 = arith.mulf %366, %374 : vector<2x16xf32>
    %383 = arith.addf %381, %382 : vector<2x16xf32>
    %384 = math.tanh %383 : vector<2x16xf32>
    %385 = arith.mulf %380, %384 : vector<2x16xf32>
    %386 = vector.extract_strided_slice %243 {offsets = [10, 0], sizes = [2, 64], strides = [1, 1]} : vector<16x64xf32> to vector<2x64xf32>
    %cst_75 = arith.constant dense<0.000000e+00> : vector<2x64xf32>
    %387 = tpu.matmul %385, %239, %cst_75 {dimension_numbers = #tpu.dot_dimension_numbers<[1], [0], [0], [1], [0, 0, 1, 1], [], []>} : vector<2x16xf32>, vector<16x64xf32>, vector<2x64xf32> -> vector<2x64xf32>
    %388 = arith.addf %386, %387 : vector<2x64xf32>
    %389 = vector.extract_strided_slice %388 {offsets = [0, 0], sizes = [2, 16], strides = [1, 1]} : vector<2x64xf32> to vector<2x16xf32>
    %390 = arith.negf %389 : vector<2x16xf32>
    %391 = math.exp %390 : vector<2x16xf32>
    %cst_76 = arith.constant 1.000000e+00 : f32
    %392 = vector.broadcast %cst_76 : f32 to vector<2x16xf32>
    %393 = arith.addf %392, %391 : vector<2x16xf32>
    %394 = arith.divf %392, %393 : vector<2x16xf32>
    %395 = vector.extract_strided_slice %388 {offsets = [0, 16], sizes = [2, 16], strides = [1, 1]} : vector<2x64xf32> to vector<2x16xf32>
    %396 = arith.negf %395 : vector<2x16xf32>
    %397 = math.exp %396 : vector<2x16xf32>
    %cst_77 = arith.constant 1.000000e+00 : f32
    %398 = vector.broadcast %cst_77 : f32 to vector<2x16xf32>
    %399 = arith.addf %398, %397 : vector<2x16xf32>
    %400 = arith.divf %398, %399 : vector<2x16xf32>
    %401 = vector.extract_strided_slice %388 {offsets = [0, 32], sizes = [2, 16], strides = [1, 1]} : vector<2x64xf32> to vector<2x16xf32>
    %402 = math.tanh %401 : vector<2x16xf32>
    %403 = vector.extract_strided_slice %388 {offsets = [0, 48], sizes = [2, 16], strides = [1, 1]} : vector<2x64xf32> to vector<2x16xf32>
    %404 = arith.negf %403 : vector<2x16xf32>
    %405 = math.exp %404 : vector<2x16xf32>
    %cst_78 = arith.constant 1.000000e+00 : f32
    %406 = vector.broadcast %cst_78 : f32 to vector<2x16xf32>
    %407 = arith.addf %406, %405 : vector<2x16xf32>
    %408 = arith.divf %406, %407 : vector<2x16xf32>
    %409 = arith.mulf %400, %383 : vector<2x16xf32>
    %410 = arith.mulf %394, %402 : vector<2x16xf32>
    %411 = arith.addf %409, %410 : vector<2x16xf32>
    %412 = math.tanh %411 : vector<2x16xf32>
    %413 = arith.mulf %408, %412 : vector<2x16xf32>
    %414 = vector.extract_strided_slice %243 {offsets = [12, 0], sizes = [2, 64], strides = [1, 1]} : vector<16x64xf32> to vector<2x64xf32>
    %cst_79 = arith.constant dense<0.000000e+00> : vector<2x64xf32>
    %415 = tpu.matmul %413, %239, %cst_79 {dimension_numbers = #tpu.dot_dimension_numbers<[1], [0], [0], [1], [0, 0, 1, 1], [], []>} : vector<2x16xf32>, vector<16x64xf32>, vector<2x64xf32> -> vector<2x64xf32>
    %416 = arith.addf %414, %415 : vector<2x64xf32>
    %417 = vector.extract_strided_slice %416 {offsets = [0, 0], sizes = [2, 16], strides = [1, 1]} : vector<2x64xf32> to vector<2x16xf32>
    %418 = arith.negf %417 : vector<2x16xf32>
    %419 = math.exp %418 : vector<2x16xf32>
    %cst_80 = arith.constant 1.000000e+00 : f32
    %420 = vector.broadcast %cst_80 : f32 to vector<2x16xf32>
    %421 = arith.addf %420, %419 : vector<2x16xf32>
    %422 = arith.divf %420, %421 : vector<2x16xf32>
    %423 = vector.extract_strided_slice %416 {offsets = [0, 16], sizes = [2, 16], strides = [1, 1]} : vector<2x64xf32> to vector<2x16xf32>
    %424 = arith.negf %423 : vector<2x16xf32>
    %425 = math.exp %424 : vector<2x16xf32>
    %cst_81 = arith.constant 1.000000e+00 : f32
    %426 = vector.broadcast %cst_81 : f32 to vector<2x16xf32>
    %427 = arith.addf %426, %425 : vector<2x16xf32>
    %428 = arith.divf %426, %427 : vector<2x16xf32>
    %429 = vector.extract_strided_slice %416 {offsets = [0, 32], sizes = [2, 16], strides = [1, 1]} : vector<2x64xf32> to vector<2x16xf32>
    %430 = math.tanh %429 : vector<2x16xf32>
    %431 = vector.extract_strided_slice %416 {offsets = [0, 48], sizes = [2, 16], strides = [1, 1]} : vector<2x64xf32> to vector<2x16xf32>
    %432 = arith.negf %431 : vector<2x16xf32>
    %433 = math.exp %432 : vector<2x16xf32>
    %cst_82 = arith.constant 1.000000e+00 : f32
    %434 = vector.broadcast %cst_82 : f32 to vector<2x16xf32>
    %435 = arith.addf %434, %433 : vector<2x16xf32>
    %436 = arith.divf %434, %435 : vector<2x16xf32>
    %437 = arith.mulf %428, %411 : vector<2x16xf32>
    %438 = arith.mulf %422, %430 : vector<2x16xf32>
    %439 = arith.addf %437, %438 : vector<2x16xf32>
    %440 = math.tanh %439 : vector<2x16xf32>
    %441 = arith.mulf %436, %440 : vector<2x16xf32>
    %442 = vector.extract_strided_slice %243 {offsets = [14, 0], sizes = [2, 64], strides = [1, 1]} : vector<16x64xf32> to vector<2x64xf32>
    %cst_83 = arith.constant dense<0.000000e+00> : vector<2x64xf32>
    %443 = tpu.matmul %441, %239, %cst_83 {dimension_numbers = #tpu.dot_dimension_numbers<[1], [0], [0], [1], [0, 0, 1, 1], [], []>} : vector<2x16xf32>, vector<16x64xf32>, vector<2x64xf32> -> vector<2x64xf32>
    %444 = arith.addf %442, %443 : vector<2x64xf32>
    %445 = vector.extract_strided_slice %444 {offsets = [0, 0], sizes = [2, 16], strides = [1, 1]} : vector<2x64xf32> to vector<2x16xf32>
    %446 = arith.negf %445 : vector<2x16xf32>
    %447 = math.exp %446 : vector<2x16xf32>
    %cst_84 = arith.constant 1.000000e+00 : f32
    %448 = vector.broadcast %cst_84 : f32 to vector<2x16xf32>
    %449 = arith.addf %448, %447 : vector<2x16xf32>
    %450 = arith.divf %448, %449 : vector<2x16xf32>
    %451 = vector.extract_strided_slice %444 {offsets = [0, 16], sizes = [2, 16], strides = [1, 1]} : vector<2x64xf32> to vector<2x16xf32>
    %452 = arith.negf %451 : vector<2x16xf32>
    %453 = math.exp %452 : vector<2x16xf32>
    %cst_85 = arith.constant 1.000000e+00 : f32
    %454 = vector.broadcast %cst_85 : f32 to vector<2x16xf32>
    %455 = arith.addf %454, %453 : vector<2x16xf32>
    %456 = arith.divf %454, %455 : vector<2x16xf32>
    %457 = vector.extract_strided_slice %444 {offsets = [0, 32], sizes = [2, 16], strides = [1, 1]} : vector<2x64xf32> to vector<2x16xf32>
    %458 = math.tanh %457 : vector<2x16xf32>
    %459 = vector.extract_strided_slice %444 {offsets = [0, 48], sizes = [2, 16], strides = [1, 1]} : vector<2x64xf32> to vector<2x16xf32>
    %460 = arith.negf %459 : vector<2x16xf32>
    %461 = math.exp %460 : vector<2x16xf32>
    %cst_86 = arith.constant 1.000000e+00 : f32
    %462 = vector.broadcast %cst_86 : f32 to vector<2x16xf32>
    %463 = arith.addf %462, %461 : vector<2x16xf32>
    %464 = arith.divf %462, %463 : vector<2x16xf32>
    %465 = arith.mulf %456, %439 : vector<2x16xf32>
    %466 = arith.mulf %450, %458 : vector<2x16xf32>
    %467 = arith.addf %465, %466 : vector<2x16xf32>
    %468 = math.tanh %467 : vector<2x16xf32>
    %469 = arith.mulf %464, %468 : vector<2x16xf32>
    %c0_87 = arith.constant 0 : index
    %c0_88 = arith.constant 0 : index
    %470 = vector.load %arg4[%c0_87, %c0_88] : memref<8x8xf32, #tpu.memory_space<vmem>>, vector<8x8xf32>
    %c0_89 = arith.constant 0 : index
    %c0_90 = arith.constant 0 : index
    %471 = vector.load %arg5[%c0_89, %c0_90] : memref<8x1xf32, #tpu.memory_space<vmem>>, vector<8x1xf32>
    %472 = vector.extract_strided_slice %273 {offsets = [0, 0], sizes = [1, 16], strides = [1, 1]} : vector<2x16xf32> to vector<1x16xf32>
    %473 = vector.extract_strided_slice %301 {offsets = [0, 0], sizes = [1, 16], strides = [1, 1]} : vector<2x16xf32> to vector<1x16xf32>
    %474 = vector.extract_strided_slice %329 {offsets = [0, 0], sizes = [1, 16], strides = [1, 1]} : vector<2x16xf32> to vector<1x16xf32>
    %475 = vector.extract_strided_slice %357 {offsets = [0, 0], sizes = [1, 16], strides = [1, 1]} : vector<2x16xf32> to vector<1x16xf32>
    %476 = vector.extract_strided_slice %385 {offsets = [0, 0], sizes = [1, 16], strides = [1, 1]} : vector<2x16xf32> to vector<1x16xf32>
    %477 = vector.extract_strided_slice %413 {offsets = [0, 0], sizes = [1, 16], strides = [1, 1]} : vector<2x16xf32> to vector<1x16xf32>
    %478 = vector.extract_strided_slice %441 {offsets = [0, 0], sizes = [1, 16], strides = [1, 1]} : vector<2x16xf32> to vector<1x16xf32>
    %479 = vector.extract_strided_slice %469 {offsets = [0, 0], sizes = [1, 16], strides = [1, 1]} : vector<2x16xf32> to vector<1x16xf32>
    %480 = tpu.concatenate %472, %473, %474, %475, %476, %477, %478, %479 in 0 : vector<1x16xf32>, vector<1x16xf32>, vector<1x16xf32>, vector<1x16xf32>, vector<1x16xf32>, vector<1x16xf32>, vector<1x16xf32>, vector<1x16xf32> -> vector<8x16xf32>
    %cst_91 = arith.constant dense<0.000000e+00> : vector<8x16xf32>
    %481 = tpu.matmul %470, %480, %cst_91 {dimension_numbers = #tpu.dot_dimension_numbers<[1], [0], [0], [1], [0, 0, 1, 1], [], []>} : vector<8x8xf32>, vector<8x16xf32>, vector<8x16xf32> -> vector<8x16xf32>
    %482 = vector.broadcast %471 : vector<8x1xf32> to vector<8x16xf32>
    %483 = arith.addf %481, %482 : vector<8x16xf32>
    %c0_92 = arith.constant 0 : index
    %c0_93 = arith.constant 0 : index
    %c0_94 = arith.constant 0 : index
    %484 = vector.load %arg12[%c0_92, %c0_93, %c0_94] : memref<2x8x16xf32, #tpu.memory_space<vmem>>, vector<1x8x16xf32>
    %485 = vector.shape_cast %484 : vector<1x8x16xf32> to vector<8x16xf32>
    %486 = vector.shape_cast %483 : vector<8x16xf32> to vector<1x8x16xf32>
    tpu.vector_store %arg12[%c0_92, %c0_93, %c0_94], %486 {strides = array<i32>} : memref<2x8x16xf32, #tpu.memory_space<vmem>>, vector<1x8x16xf32>,
    %487 = vector.extract_strided_slice %273 {offsets = [1, 0], sizes = [1, 16], strides = [1, 1]} : vector<2x16xf32> to vector<1x16xf32>
    %488 = vector.extract_strided_slice %301 {offsets = [1, 0], sizes = [1, 16], strides = [1, 1]} : vector<2x16xf32> to vector<1x16xf32>
    %489 = vector.extract_strided_slice %329 {offsets = [1, 0], sizes = [1, 16], strides = [1, 1]} : vector<2x16xf32> to vector<1x16xf32>
    %490 = vector.extract_strided_slice %357 {offsets = [1, 0], sizes = [1, 16], strides = [1, 1]} : vector<2x16xf32> to vector<1x16xf32>
    %491 = vector.extract_strided_slice %385 {offsets = [1, 0], sizes = [1, 16], strides = [1, 1]} : vector<2x16xf32> to vector<1x16xf32>
    %492 = vector.extract_strided_slice %413 {offsets = [1, 0], sizes = [1, 16], strides = [1, 1]} : vector<2x16xf32> to vector<1x16xf32>
    %493 = vector.extract_strided_slice %441 {offsets = [1, 0], sizes = [1, 16], strides = [1, 1]} : vector<2x16xf32> to vector<1x16xf32>
    %494 = vector.extract_strided_slice %469 {offsets = [1, 0], sizes = [1, 16], strides = [1, 1]} : vector<2x16xf32> to vector<1x16xf32>
    %495 = tpu.concatenate %487, %488, %489, %490, %491, %492, %493, %494 in 0 : vector<1x16xf32>, vector<1x16xf32>, vector<1x16xf32>, vector<1x16xf32>, vector<1x16xf32>, vector<1x16xf32>, vector<1x16xf32>, vector<1x16xf32> -> vector<8x16xf32>
    %cst_95 = arith.constant dense<0.000000e+00> : vector<8x16xf32>
    %496 = tpu.matmul %470, %495, %cst_95 {dimension_numbers = #tpu.dot_dimension_numbers<[1], [0], [0], [1], [0, 0, 1, 1], [], []>} : vector<8x8xf32>, vector<8x16xf32>, vector<8x16xf32> -> vector<8x16xf32>
    %497 = vector.broadcast %471 : vector<8x1xf32> to vector<8x16xf32>
    %498 = arith.addf %496, %497 : vector<8x16xf32>
    %c1 = arith.constant 1 : index
    %c0_96 = arith.constant 0 : index
    %c0_97 = arith.constant 0 : index
    %499 = vector.load %arg12[%c1, %c0_96, %c0_97] : memref<2x8x16xf32, #tpu.memory_space<vmem>>, vector<1x8x16xf32>
    %500 = vector.shape_cast %499 : vector<1x8x16xf32> to vector<8x16xf32>
    %501 = vector.shape_cast %498 : vector<8x16xf32> to vector<1x8x16xf32>
    tpu.vector_store %arg12[%c1, %c0_96, %c0_97], %501 {strides = array<i32>} : memref<2x8x16xf32, #tpu.memory_space<vmem>>, vector<1x8x16xf32>,
    return
  }
  func.func @transform_0(%arg0: i32) -> (i32, i32) {
    %c0_i32 = arith.constant 0 : i32
    %c0_i32_0 = arith.constant 0 : i32
    %c0_i32_1 = arith.constant 0 : i32
    return %c0_i32, %c0_i32_0 : i32, i32
  }
  func.func @transform_1(%arg0: i32) -> (i32, i32) {
    %c0_i32 = arith.constant 0 : i32
    %c0_i32_0 = arith.constant 0 : i32
    %c0_i32_1 = arith.constant 0 : i32
    return %c0_i32, %c0_i32_0 : i32, i32
  }
  func.func @transform_2(%arg0: i32) -> (i32, i32) {
    %c0_i32 = arith.constant 0 : i32
    %c0_i32_0 = arith.constant 0 : i32
    %c0_i32_1 = arith.constant 0 : i32
    return %c0_i32, %c0_i32_0 : i32, i32
  }
  func.func @transform_3(%arg0: i32) -> (i32, i32) {
    %c0_i32 = arith.constant 0 : i32
    %c0_i32_0 = arith.constant 0 : i32
    %c0_i32_1 = arith.constant 0 : i32
    return %c0_i32, %c0_i32_0 : i32, i32
  }
  func.func @transform_4(%arg0: i32) -> (i32, i32) {
    %c0_i32 = arith.constant 0 : i32
    %c0_i32_0 = arith.constant 0 : i32
    %c0_i32_1 = arith.constant 0 : i32
    return %c0_i32, %c0_i32_0 : i32, i32
  }
  func.func @transform_5(%arg0: i32) -> (i32, i32) {
    %c0_i32 = arith.constant 0 : i32
    %c0_i32_0 = arith.constant 0 : i32
    %c0_i32_1 = arith.constant 0 : i32
    return %c0_i32, %c0_i32_0 : i32, i32
  }
  func.func @transform_6(%arg0: i32) -> (i32, i32) {
    %c0_i32 = arith.constant 0 : i32
    %c0_i32_0 = arith.constant 0 : i32
    %c0_i32_1 = arith.constant 0 : i32
    return %c0_i32, %c0_i32_0 : i32, i32
  }
  func.func @transform_7(%arg0: i32) -> (i32, i32) {
    %c0_i32 = arith.constant 0 : i32
    %c0_i32_0 = arith.constant 0 : i32
    %c0_i32_1 = arith.constant 0 : i32
    return %c0_i32, %c0_i32_0 : i32, i32
  }
  func.func @transform_8(%arg0: i32) -> (i32, i32) {
    %c0_i32 = arith.constant 0 : i32
    %c0_i32_0 = arith.constant 0 : i32
    %c0_i32_1 = arith.constant 0 : i32
    return %c0_i32, %c0_i32_0 : i32, i32
  }
  func.func @transform_9(%arg0: i32) -> (i32, i32) {
    %c0_i32 = arith.constant 0 : i32
    %c0_i32_0 = arith.constant 0 : i32
    %c0_i32_1 = arith.constant 0 : i32
    return %c0_i32, %c0_i32_0 : i32, i32
  }
  func.func @transform_10(%arg0: i32) -> (i32, i32) {
    %c0_i32 = arith.constant 0 : i32
    %c0_i32_0 = arith.constant 0 : i32
    %c0_i32_1 = arith.constant 0 : i32
    return %c0_i32, %c0_i32_0 : i32, i32
  }
  func.func @transform_11(%arg0: i32) -> (i32, i32, i32) {
    %c0_i32 = arith.constant 0 : i32
    %c0_i32_0 = arith.constant 0 : i32
    %c0_i32_1 = arith.constant 0 : i32
    %c0_i32_2 = arith.constant 0 : i32
    return %c0_i32, %c0_i32_0, %c0_i32_1 : i32, i32, i32
  }
}

</mosaic_0001>

<llo_original>
// kernel: model_forward.1
$region0: #{model_forward.1}
  #allocation0 [shape = 'u32[]', space=smem, size = 0x4, offset = 0x4, fixed_abs, tag = 'smem constant byte address 0x4 - core index']
  #allocation1 [shape = 'u32[144,128]{1,0:T(1,128)}', space=vmem, size = 0x12000, scoped, tag = 'internal scratch']
  %s0 = inlined_call_operand.vmem [shape: f32[16,16], index: 0, kind: input, shape index: {}]
  %s1 = inlined_call_operand.vmem [shape: f32[16,32], index: 1, kind: input, shape index: {}]
  %s2 = inlined_call_operand.vmem [shape: f32[16,32], index: 2, kind: input, shape index: {}]
  %s3 = inlined_call_operand.vmem [shape: f32[8,8], index: 3, kind: input, shape index: {}]
  %s4 = inlined_call_operand.vmem [shape: f32[8,1], index: 4, kind: input, shape index: {}]
  %s5 = inlined_call_operand.vmem [shape: f32[32,64], index: 5, kind: input, shape index: {}]
  %s6 = inlined_call_operand.vmem [shape: f32[16,64], index: 6, kind: input, shape index: {}]
  %s7 = inlined_call_operand.vmem [shape: f32[1,64], index: 7, kind: input, shape index: {}]
  %s8 = inlined_call_operand.vmem [shape: f32[16,64], index: 8, kind: input, shape index: {}]
  %s9 = inlined_call_operand.vmem [shape: f32[16,64], index: 9, kind: input, shape index: {}]
  %s10 = inlined_call_operand.vmem [shape: f32[1,64], index: 10, kind: input, shape index: {}]
  %s11 = inlined_call_operand.hbm [shape: f32[2,8,16], index: 11, kind: output, shape index: {}]
  %s12 = sld [smem:[#allocation0]]
  $region54: #{model_forward.1} parent=0
    _
  %s14 = ssub.s32 1, %s12
  %s15 = scalar_select 0, %s14, %s12
  $region1: #{model_forward.1} parent=0
    #allocation2 [shape = 'u8[8192]{0}', space=vmem, size = 0x2000, scoped, tag = 'output window, operand 0, single buffered']
    #allocation3 [shape = 's32[1]{0}', space=sflag, size = 0x4, scoped, tag = 'scoped memory for model_forward.1']
    %16 = vsyncpa [#allocation3], 0
    // Predicated region
    $region2: #{model_forward.1} parent=1 // pred_check
      _
    $region3: #{model_forward.1} parent=1 // pred_check_branch
      %18 = sbr.rel (0) target = $region5
    $region4: #{model_forward.1} parent=1 // pred_region
      _
    $region5: #{model_forward.1} parent=1 // pred_fallthru
      _
    // Predicated region
    $region6: #{model_forward.1} parent=1 // pred_check
      _
    $region7: #{model_forward.1} parent=1 // pred_check_branch
      %20 = sbr.rel (0) target = $region9
    $region8: #{model_forward.1} parent=1 // pred_region
      _
    $region9: #{model_forward.1} parent=1 // pred_fallthru
      _
    // Predicated region
    $region10: #{model_forward.1} parent=1 // pred_check
      _
    $region11: #{model_forward.1} parent=1 // pred_check_branch
      %22 = sbr.rel (0) target = $region13
    $region12: #{model_forward.1} parent=1 // pred_region
      _
    $region13: #{model_forward.1} parent=1 // pred_fallthru
      _
    // Predicated region
    $region14: #{model_forward.1} parent=1 // pred_check
      _
    $region15: #{model_forward.1} parent=1 // pred_check_branch
      %24 = sbr.rel (0) target = $region17
    $region16: #{model_forward.1} parent=1 // pred_region
      _
    $region17: #{model_forward.1} parent=1 // pred_fallthru
      _
    // Predicated region
    $region18: #{model_forward.1} parent=1 // pred_check
      _
    $region19: #{model_forward.1} parent=1 // pred_check_branch
      %26 = sbr.rel (0) target = $region21
    $region20: #{model_forward.1} parent=1 // pred_region
      _
    $region21: #{model_forward.1} parent=1 // pred_fallthru
      _
    // Predicated region
    $region22: #{model_forward.1} parent=1 // pred_check
      _
    $region23: #{model_forward.1} parent=1 // pred_check_branch
      %28 = sbr.rel (0) target = $region25
    $region24: #{model_forward.1} parent=1 // pred_region
      _
    $region25: #{model_forward.1} parent=1 // pred_fallthru
      _
    // Predicated region
    $region26: #{model_forward.1} parent=1 // pred_check
      _
    $region27: #{model_forward.1} parent=1 // pred_check_branch
      %30 = sbr.rel (0) target = $region29
    $region28: #{model_forward.1} parent=1 // pred_region
      _
    $region29: #{model_forward.1} parent=1 // pred_fallthru
      _
    // Predicated region
    $region30: #{model_forward.1} parent=1 // pred_check
      _
    $region31: #{model_forward.1} parent=1 // pred_check_branch
      %32 = sbr.rel (0) target = $region33
    $region32: #{model_forward.1} parent=1 // pred_region
      _
    $region33: #{model_forward.1} parent=1 // pred_fallthru
      _
    // Predicated region
    $region34: #{model_forward.1} parent=1 // pred_check
      _
    $region35: #{model_forward.1} parent=1 // pred_check_branch
      %34 = sbr.rel (0) target = $region37
    $region36: #{model_forward.1} parent=1 // pred_region
      _
    $region37: #{model_forward.1} parent=1 // pred_fallthru
      _
    // Predicated region
    $region38: #{model_forward.1} parent=1 // pred_check
      _
    $region39: #{model_forward.1} parent=1 // pred_check_branch
      %36 = sbr.rel (0) target = $region41
    $region40: #{model_forward.1} parent=1 // pred_region
      _
    $region41: #{model_forward.1} parent=1 // pred_fallthru
      _
    // Predicated region
    $region42: #{model_forward.1} parent=1 // pred_check
      _
    $region43: #{model_forward.1} parent=1 // pred_check_branch
      %38 = sbr.rel (0) target = $region45
    $region44: #{model_forward.1} parent=1 // pred_region
      _
    $region45: #{model_forward.1} parent=1 // pred_fallthru
      _
    %v39 = vld [vmem:[%s0] sm:$0xff]
    %v40 = vld [vmem:[%s0 + $0x8] sm:$0xff]
    %v41 = vld [vmem:[%s2] sm:$0xff]
    %v42 = vld [vmem:[%s2 + $0x8] sm:$0xff]
    %v43 = vld [vmem:[%s1] sm:$0xff]
    %v44 = vld [vmem:[%s1 + $0x8] sm:$0xff]
    %vm45 = vcmask 130048
    %v47 = vsel %vm45, %v39, 0
    %v50 = vsel %vm45, %v40, 0
    %52 = vmatprep.subr.mxu0 0.0
    %53 = vmatpush1.msra.mxu0 0.0
    %54 = vmatprep.subr.mxu0 0.0
    %55 = vmatpush1.msra.mxu0 0.0
    %56 = vmatprep.subr.mxu0 0.0
    %57 = vmatpush1.msra.mxu0 0.0
    %58 = vmatprep.subr.mxu0 0.0
    %59 = vmatpush1.msra.mxu0 0.0
    %60 = vmatprep.subr.mxu0 0.0
    %61 = vmatpush1.msra.mxu0 0.0
    %62 = vmatprep.subr.mxu0 0.0
    %63 = vmatpush1.msra.mxu0 0.0
    %64 = vmatprep.subr.mxu0 0.0
    %65 = vmatpush1.msra.mxu0 0.0
    %66 = vmatprep.subr.mxu0 0.0
    %67 = vmatpush1.msra.mxu0 0.0
    %68 = vmatprep.subr.mxu0 0.0
    %69 = vmatpush1.msra.mxu0 0.0
    %70 = vmatprep.subr.mxu0 0.0
    %71 = vmatpush1.msra.mxu0 0.0
    %72 = vmatprep.subr.mxu0 0.0
    %73 = vmatpush1.msra.mxu0 0.0
    %74 = vmatprep.subr.mxu0 0.0
    %75 = vmatpush1.msra.mxu0 0.0
    %76 = vmatprep.subr.mxu0 0.0
    %77 = vmatpush1.msra.mxu0 0.0
    %78 = vmatprep.subr.mxu0 0.0
    %79 = vmatpush1.msra.mxu0 0.0
    %80 = vmatprep.subr.mxu0 0.0
    %81 = vmatpush1.msra.mxu0 %v42
    %82 = vmatprep.subr.mxu0 0.0
    %83 = vmatpush1.msra.mxu0 %v41
    %84 = vmatprep.subr.mxu0 0.0
    %85 = vmatpush2.msra.mxu0 0.0
    %86 = vmatprep.subr.mxu0 0.0
    %87 = vmatpush2.msra.mxu0 0.0
    %88 = vmatprep.subr.mxu0 0.0
    %89 = vmatpush2.msra.mxu0 0.0
    %90 = vmatprep.subr.mxu0 0.0
    %91 = vmatpush2.msra.mxu0 0.0
    %92 = vmatprep.subr.mxu0 0.0
    %93 = vmatpush2.msra.mxu0 0.0
    %94 = vmatprep.subr.mxu0 0.0
    %95 = vmatpush2.msra.mxu0 0.0
    %96 = vmatprep.subr.mxu0 0.0
    %97 = vmatpush2.msra.mxu0 0.0
    %98 = vmatprep.subr.mxu0 0.0
    %99 = vmatpush2.msra.mxu0 0.0
    %100 = vmatprep.subr.mxu0 0.0
    %101 = vmatpush2.msra.mxu0 0.0
    %102 = vmatprep.subr.mxu0 0.0
    %103 = vmatpush2.msra.mxu0 0.0
    %104 = vmatprep.subr.mxu0 0.0
    %105 = vmatpush2.msra.mxu0 0.0
    %106 = vmatprep.subr.mxu0 0.0
    %107 = vmatpush2.msra.mxu0 0.0
    %108 = vmatprep.subr.mxu0 0.0
    %109 = vmatpush2.msra.mxu0 0.0
    %110 = vmatprep.subr.mxu0 0.0
    %111 = vmatpush2.msra.mxu0 0.0
    %112 = vmatprep.subr.mxu0 0.0
    %113 = vmatpush2.msra.mxu0 0.0
    %114 = vmatprep.subr.mxu0 0.0
    %115 = vmatpush2.msra.mxu0 0.0
    %116 = vmatprep.mubr.f32.mxu0 0.0
    %117 = vmatmul.mubr.f32.gmra.mxu0 %v47
    %v118 = vpop.f32.mrf.mxu0
    %v119 = vadd.f32 %v43, %v118
    %v120 = vpop.f32.mrf.mxu0
    %121 = vmatprep.mubr.f32.mxu0 0.0
    %122 = vmatmul.mubr.f32.gmra.mxu0 %v50
    %v123 = vpop.f32.mrf.mxu0
    %v124 = vadd.f32 %v44, %v123
    %v125 = vpop.f32.mrf.mxu0
    %126 = vdwg.mxu0
    %v127 = vld [vmem:[%s5] sm:$0xff]
    %v128 = vld [vmem:[%s5 + $0x8] sm:$0xff]
    %v129 = vld [vmem:[%s5 + $0x10] sm:$0xff]
    %v130 = vld [vmem:[%s5 + $0x18] sm:$0xff]
    %v131 = vld [vmem:[%s6] sm:$0xff]
    %v132 = vld [vmem:[%s6 + $0x8] sm:$0xff]
    %v133 = vld [vmem:[%s7] sm:$0x1]
    %v135 = vlaneseq
    %v136 = vshrl.u32 %v135, 7
    %v137 = vsub.s32 0, %v136
    %v138 = vrot.slane %v133, %v137
    %vm140 = vcmask 261120
    %v142 = vsel %vm140, %v119, 0
    %v145 = vsel %vm140, %v124, 0
    %147 = vmatprep.subr.mxu0 0.0
    %148 = vmatpush1.msra.mxu0 0.0
    %149 = vmatprep.subr.mxu0 0.0
    %150 = vmatpush1.msra.mxu0 0.0
    %151 = vmatprep.subr.mxu0 0.0
    %152 = vmatpush1.msra.mxu0 0.0
    %153 = vmatprep.subr.mxu0 0.0
    %154 = vmatpush1.msra.mxu0 0.0
    %155 = vmatprep.subr.mxu0 0.0
    %156 = vmatpush1.msra.mxu0 0.0
    %157 = vmatprep.subr.mxu0 0.0
    %158 = vmatpush1.msra.mxu0 0.0
    %159 = vmatprep.subr.mxu0 0.0
    %160 = vmatpush1.msra.mxu0 0.0
    %161 = vmatprep.subr.mxu0 0.0
    %162 = vmatpush1.msra.mxu0 0.0
    %163 = vmatprep.subr.mxu0 0.0
    %164 = vmatpush1.msra.mxu0 0.0
    %165 = vmatprep.subr.mxu0 0.0
    %166 = vmatpush1.msra.mxu0 0.0
    %167 = vmatprep.subr.mxu0 0.0
    %168 = vmatpush1.msra.mxu0 0.0
    %169 = vmatprep.subr.mxu0 0.0
    %170 = vmatpush1.msra.mxu0 0.0
    %171 = vmatprep.subr.mxu0 0.0
    %172 = vmatpush1.msra.mxu0 %v130
    %173 = vmatprep.subr.mxu0 0.0
    %174 = vmatpush1.msra.mxu0 %v129
    %175 = vmatprep.subr.mxu0 0.0
    %176 = vmatpush1.msra.mxu0 %v128
    %177 = vmatprep.subr.mxu0 0.0
    %178 = vmatpush1.msra.mxu0 %v127
    %179 = vmatprep.subr.mxu0 0.0
    %180 = vmatpush2.msra.mxu0 0.0
    %181 = vmatprep.subr.mxu0 0.0
    %182 = vmatpush2.msra.mxu0 0.0
    %183 = vmatprep.subr.mxu0 0.0
    %184 = vmatpush2.msra.mxu0 0.0
    %185 = vmatprep.subr.mxu0 0.0
    %186 = vmatpush2.msra.mxu0 0.0
    %187 = vmatprep.subr.mxu0 0.0
    %188 = vmatpush2.msra.mxu0 0.0
    %189 = vmatprep.subr.mxu0 0.0
    %190 = vmatpush2.msra.mxu0 0.0
    %191 = vmatprep.subr.mxu0 0.0
    %192 = vmatpush2.msra.mxu0 0.0
    %193 = vmatprep.subr.mxu0 0.0
    %194 = vmatpush2.msra.mxu0 0.0
    %195 = vmatprep.subr.mxu0 0.0
    %196 = vmatpush2.msra.mxu0 0.0
    %197 = vmatprep.subr.mxu0 0.0
    %198 = vmatpush2.msra.mxu0 0.0
    %199 = vmatprep.subr.mxu0 0.0
    %200 = vmatpush2.msra.mxu0 0.0
    %201 = vmatprep.subr.mxu0 0.0
    %202 = vmatpush2.msra.mxu0 0.0
    %203 = vmatprep.subr.mxu0 0.0
    %204 = vmatpush2.msra.mxu0 0.0
    %205 = vmatprep.subr.mxu0 0.0
    %206 = vmatpush2.msra.mxu0 0.0
    %207 = vmatprep.subr.mxu0 0.0
    %208 = vmatpush2.msra.mxu0 0.0
    %209 = vmatprep.subr.mxu0 0.0
    %210 = vmatpush2.msra.mxu0 0.0
    %211 = vmatprep.mubr.f32.mxu0 0.0
    %212 = vmatmul.mubr.f32.gmra.mxu0 %v142
    %v213 = vpop.f32.mrf.mxu0
    %v214 = vadd.f32 %v138, %v213
    %v215 = vpop.f32.mrf.mxu0
    %216 = vmatprep.mubr.f32.mxu0 0.0
    %217 = vmatmul.mubr.f32.gmra.mxu0 %v145
    %v218 = vpop.f32.mrf.mxu0
    %v219 = vadd.f32 %v138, %v218
    %v220 = vpop.f32.mrf.mxu0
    %221 = vdwg.mxu0
    %v223 = vsel %vm45, 0.0, 0
    %225 = vmatprep.subr.mxu0 0.0
    %226 = vmatpush1.msra.mxu0 0.0
    %227 = vmatprep.subr.mxu0 0.0
    %228 = vmatpush1.msra.mxu0 0.0
    %229 = vmatprep.subr.mxu0 0.0
    %230 = vmatpush1.msra.mxu0 0.0
    %231 = vmatprep.subr.mxu0 0.0
    %232 = vmatpush1.msra.mxu0 0.0
    %233 = vmatprep.subr.mxu0 0.0
    %234 = vmatpush1.msra.mxu0 0.0
    %235 = vmatprep.subr.mxu0 0.0
    %236 = vmatpush1.msra.mxu0 0.0
    %237 = vmatprep.subr.mxu0 0.0
    %238 = vmatpush1.msra.mxu0 0.0
    %239 = vmatprep.subr.mxu0 0.0
    %240 = vmatpush1.msra.mxu0 0.0
    %241 = vmatprep.subr.mxu0 0.0
    %242 = vmatpush1.msra.mxu0 0.0
    %243 = vmatprep.subr.mxu0 0.0
    %244 = vmatpush1.msra.mxu0 0.0
    %245 = vmatprep.subr.mxu0 0.0
    %246 = vmatpush1.msra.mxu0 0.0
    %247 = vmatprep.subr.mxu0 0.0
    %248 = vmatpush1.msra.mxu0 0.0
    %249 = vmatprep.subr.mxu0 0.0
    %250 = vmatpush1.msra.mxu0 0.0
    %251 = vmatprep.subr.mxu0 0.0
    %252 = vmatpush1.msra.mxu0 0.0
    %253 = vmatprep.subr.mxu0 0.0
    %254 = vmatpush1.msra.mxu0 %v132
    %255 = vmatprep.subr.mxu0 0.0
    %256 = vmatpush1.msra.mxu0 %v131
    %257 = vmatprep.subr.mxu0 0.0
    %258 = vmatpush2.msra.mxu0 0.0
    %259 = vmatprep.subr.mxu0 0.0
    %260 = vmatpush2.msra.mxu0 0.0
    %261 = vmatprep.subr.mxu0 0.0
    %262 = vmatpush2.msra.mxu0 0.0
    %263 = vmatprep.subr.mxu0 0.0
    %264 = vmatpush2.msra.mxu0 0.0
    %265 = vmatprep.subr.mxu0 0.0
    %266 = vmatpush2.msra.mxu0 0.0
    %267 = vmatprep.subr.mxu0 0.0
    %268 = vmatpush2.msra.mxu0 0.0
    %269 = vmatprep.subr.mxu0 0.0
    %270 = vmatpush2.msra.mxu0 0.0
    %271 = vmatprep.subr.mxu0 0.0
    %272 = vmatpush2.msra.mxu0 0.0
    %273 = vmatprep.subr.mxu0 0.0
    %274 = vmatpush2.msra.mxu0 0.0
    %275 = vmatprep.subr.mxu0 0.0
    %276 = vmatpush2.msra.mxu0 0.0
    %277 = vmatprep.subr.mxu0 0.0
    %278 = vmatpush2.msra.mxu0 0.0
    %279 = vmatprep.subr.mxu0 0.0
    %280 = vmatpush2.msra.mxu0 0.0
    %281 = vmatprep.subr.mxu0 0.0
    %282 = vmatpush2.msra.mxu0 0.0
    %283 = vmatprep.subr.mxu0 0.0
    %284 = vmatpush2.msra.mxu0 0.0
    %285 = vmatprep.subr.mxu0 0.0
    %286 = vmatpush2.msra.mxu0 0.0
    %287 = vmatprep.subr.mxu0 0.0
    %288 = vmatpush2.msra.mxu0 0.0
    %289 = vmatprep.mubr.f32.mxu0 0.0
    %290 = vmatmul.mubr.f32.gmra.mxu0 %v223
    %v291 = vpop.f32.mrf.mxu0
    %v292 = vadd.f32 0.0, %v291
    %v293 = vpop.f32.mrf.mxu0
    %294 = vdwg.mxu0
    %v295 = vadd.f32 %v214, %v292
    %v296 = vxor.u32 %v295, 2147483648
    %v297 = vmul.f32 %v296, 1.442695
    %v298 = vpow.pop %v297
    %v299 = vadd.f32 %v298, 1.0
    %v300 = vrcp.pop %v299
    %v301 = vmul.f32 1.0, %v300
    %v302 = vtanh.pop %v295
    %v303 = vmul.f32 %v301, 0.0
    %305 = vrot.lane.b32.xlu0 %v302, 96
    %v306 = vpop.permute.xlu0 %305
    %v308 = vmul.f32 %v301, %v306
    %310 = vrot.lane.b32.xlu0 %v308, 16
    %v311 = vpop.permute.xlu0 %310
    %v313 = vadd.f32 %v303, %v311
    %v314 = vtanh.pop %v313
    %316 = vrot.lane.b32.xlu0 %v314, 32
    %v317 = vpop.permute.xlu0 %316
    %v319 = vmul.f32 %v301, %v317
    %321 = vrot.lane.b32.xlu0 %v319, 80
    %v322 = vpop.permute.xlu0 %321
    %v323 = vsel %vm45, %v322, 0
    %325 = vmatprep.subr.mxu0 0.0
    %326 = vmatpush1.msra.mxu0 0.0
    %327 = vmatprep.subr.mxu0 0.0
    %328 = vmatpush1.msra.mxu0 0.0
    %329 = vmatprep.subr.mxu0 0.0
    %330 = vmatpush1.msra.mxu0 0.0
    %331 = vmatprep.subr.mxu0 0.0
    %332 = vmatpush1.msra.mxu0 0.0
    %333 = vmatprep.subr.mxu0 0.0
    %334 = vmatpush1.msra.mxu0 0.0
    %335 = vmatprep.subr.mxu0 0.0
    %336 = vmatpush1.msra.mxu0 0.0
    %337 = vmatprep.subr.mxu0 0.0
    %338 = vmatpush1.msra.mxu0 0.0
    %339 = vmatprep.subr.mxu0 0.0
    %340 = vmatpush1.msra.mxu0 0.0
    %341 = vmatprep.subr.mxu0 0.0
    %342 = vmatpush1.msra.mxu0 0.0
    %343 = vmatprep.subr.mxu0 0.0
    %344 = vmatpush1.msra.mxu0 0.0
    %345 = vmatprep.subr.mxu0 0.0
    %346 = vmatpush1.msra.mxu0 0.0
    %347 = vmatprep.subr.mxu0 0.0
    %348 = vmatpush1.msra.mxu0 0.0
    %349 = vmatprep.subr.mxu0 0.0
    %350 = vmatpush1.msra.mxu0 0.0
    %351 = vmatprep.subr.mxu0 0.0
    %352 = vmatpush1.msra.mxu0 0.0
    %353 = vmatprep.subr.mxu0 0.0
    %354 = vmatpush1.msra.mxu0 %v132
    %355 = vmatprep.subr.mxu0 0.0
    %356 = vmatpush1.msra.mxu0 %v131
    %357 = vmatprep.subr.mxu0 0.0
    %358 = vmatpush2.msra.mxu0 0.0
    %359 = vmatprep.subr.mxu0 0.0
    %360 = vmatpush2.msra.mxu0 0.0
    %361 = vmatprep.subr.mxu0 0.0
    %362 = vmatpush2.msra.mxu0 0.0
    %363 = vmatprep.subr.mxu0 0.0
    %364 = vmatpush2.msra.mxu0 0.0
    %365 = vmatprep.subr.mxu0 0.0
    %366 = vmatpush2.msra.mxu0 0.0
    %367 = vmatprep.subr.mxu0 0.0
    %368 = vmatpush2.msra.mxu0 0.0
    %369 = vmatprep.subr.mxu0 0.0
    %370 = vmatpush2.msra.mxu0 0.0
    %371 = vmatprep.subr.mxu0 0.0
    %372 = vmatpush2.msra.mxu0 0.0
    %373 = vmatprep.subr.mxu0 0.0
    %374 = vmatpush2.msra.mxu0 0.0
    %375 = vmatprep.subr.mxu0 0.0
    %376 = vmatpush2.msra.mxu0 0.0
    %377 = vmatprep.subr.mxu0 0.0
    %378 = vmatpush2.msra.mxu0 0.0
    %379 = vmatprep.subr.mxu0 0.0
    %380 = vmatpush2.msra.mxu0 0.0
    %381 = vmatprep.subr.mxu0 0.0
    %382 = vmatpush2.msra.mxu0 0.0
    %383 = vmatprep.subr.mxu0 0.0
    %384 = vmatpush2.msra.mxu0 0.0
    %385 = vmatprep.subr.mxu0 0.0
    %386 = vmatpush2.msra.mxu0 0.0
    %387 = vmatprep.subr.mxu0 0.0
    %388 = vmatpush2.msra.mxu0 0.0
    %389 = vmatprep.mubr.f32.mxu0 0.0
    %390 = vmatmul.mubr.f32.gmra.mxu0 %v323
    %v391 = vpop.f32.mrf.mxu0
    %v392 = vadd.f32 0.0, %v391
    %v393 = vpop.f32.mrf.mxu0
    %394 = vdwg.mxu0
    %v396 = vrot.slane %v392, 6
    %v398 = vadd.f32 %v214, %v396
    %v399 = vxor.u32 %v398, 2147483648
    %v400 = vmul.f32 %v399, 1.442695
    %v401 = vpow.pop %v400
    %v402 = vadd.f32 %v401, 1.0
    %v403 = vrcp.pop %v402
    %v404 = vmul.f32 1.0, %v403
    %v405 = vtanh.pop %v398
    %v407 = vrot.slane %v313, 6
    %v409 = vmul.f32 %v404, %v407
    %411 = vrot.lane.b32.xlu0 %v405, 96
    %v412 = vpop.permute.xlu0 %411
    %v414 = vmul.f32 %v404, %v412
    %416 = vrot.lane.b32.xlu0 %v414, 16
    %v417 = vpop.permute.xlu0 %416
    %v419 = vadd.f32 %v409, %v417
    %v420 = vtanh.pop %v419
    %422 = vrot.lane.b32.xlu0 %v420, 32
    %v423 = vpop.permute.xlu0 %422
    %v425 = vmul.f32 %v404, %v423
    %v427 = vrot.slane %v425, 2
    %428 = vrot.lane.b32.xlu0 %v427, 80
    %v429 = vpop.permute.xlu0 %428
    %v430 = vsel %vm45, %v429, 0
    %432 = vmatprep.subr.mxu0 0.0
    %433 = vmatpush1.msra.mxu0 0.0
    %434 = vmatprep.subr.mxu0 0.0
    %435 = vmatpush1.msra.mxu0 0.0
    %436 = vmatprep.subr.mxu0 0.0
    %437 = vmatpush1.msra.mxu0 0.0
    %438 = vmatprep.subr.mxu0 0.0
    %439 = vmatpush1.msra.mxu0 0.0
    %440 = vmatprep.subr.mxu0 0.0
    %441 = vmatpush1.msra.mxu0 0.0
    %442 = vmatprep.subr.mxu0 0.0
    %443 = vmatpush1.msra.mxu0 0.0
    %444 = vmatprep.subr.mxu0 0.0
    %445 = vmatpush1.msra.mxu0 0.0
    %446 = vmatprep.subr.mxu0 0.0
    %447 = vmatpush1.msra.mxu0 0.0
    %448 = vmatprep.subr.mxu0 0.0
    %449 = vmatpush1.msra.mxu0 0.0
    %450 = vmatprep.subr.mxu0 0.0
    %451 = vmatpush1.msra.mxu0 0.0
    %452 = vmatprep.subr.mxu0 0.0
    %453 = vmatpush1.msra.mxu0 0.0
    %454 = vmatprep.subr.mxu0 0.0
    %455 = vmatpush1.msra.mxu0 0.0
    %456 = vmatprep.subr.mxu0 0.0
    %457 = vmatpush1.msra.mxu0 0.0
    %458 = vmatprep.subr.mxu0 0.0
    %459 = vmatpush1.msra.mxu0 0.0
    %460 = vmatprep.subr.mxu0 0.0
    %461 = vmatpush1.msra.mxu0 %v132
    %462 = vmatprep.subr.mxu0 0.0
    %463 = vmatpush1.msra.mxu0 %v131
    %464 = vmatprep.subr.mxu0 0.0
    %465 = vmatpush2.msra.mxu0 0.0
    %466 = vmatprep.subr.mxu0 0.0
    %467 = vmatpush2.msra.mxu0 0.0
    %468 = vmatprep.subr.mxu0 0.0
    %469 = vmatpush2.msra.mxu0 0.0
    %470 = vmatprep.subr.mxu0 0.0
    %471 = vmatpush2.msra.mxu0 0.0
    %472 = vmatprep.subr.mxu0 0.0
    %473 = vmatpush2.msra.mxu0 0.0
    %474 = vmatprep.subr.mxu0 0.0
    %475 = vmatpush2.msra.mxu0 0.0
    %476 = vmatprep.subr.mxu0 0.0
    %477 = vmatpush2.msra.mxu0 0.0
    %478 = vmatprep.subr.mxu0 0.0
    %479 = vmatpush2.msra.mxu0 0.0
    %480 = vmatprep.subr.mxu0 0.0
    %481 = vmatpush2.msra.mxu0 0.0
    %482 = vmatprep.subr.mxu0 0.0
    %483 = vmatpush2.msra.mxu0 0.0
    %484 = vmatprep.subr.mxu0 0.0
    %485 = vmatpush2.msra.mxu0 0.0
    %486 = vmatprep.subr.mxu0 0.0
    %487 = vmatpush2.msra.mxu0 0.0
    %488 = vmatprep.subr.mxu0 0.0
    %489 = vmatpush2.msra.mxu0 0.0
    %490 = vmatprep.subr.mxu0 0.0
    %491 = vmatpush2.msra.mxu0 0.0
    %492 = vmatprep.subr.mxu0 0.0
    %493 = vmatpush2.msra.mxu0 0.0
    %494 = vmatprep.subr.mxu0 0.0
    %495 = vmatpush2.msra.mxu0 0.0
    %496 = vmatprep.mubr.f32.mxu0 0.0
    %497 = vmatmul.mubr.f32.gmra.mxu0 %v430
    %v498 = vpop.f32.mrf.mxu0
    %v499 = vadd.f32 0.0, %v498
    %v500 = vpop.f32.mrf.mxu0
    %501 = vdwg.mxu0
    %v503 = vrot.slane %v499, 4
    %v505 = vadd.f32 %v214, %v503
    %v506 = vxor.u32 %v505, 2147483648
    %v507 = vmul.f32 %v506, 1.442695
    %v508 = vpow.pop %v507
    %v509 = vadd.f32 %v508, 1.0
    %v510 = vrcp.pop %v509
    %v511 = vmul.f32 1.0, %v510
    %v512 = vtanh.pop %v505
    %v514 = vrot.slane %v419, 6
    %v516 = vmul.f32 %v511, %v514
    %518 = vrot.lane.b32.xlu0 %v512, 96
    %v519 = vpop.permute.xlu0 %518
    %v521 = vmul.f32 %v511, %v519
    %523 = vrot.lane.b32.xlu0 %v521, 16
    %v524 = vpop.permute.xlu0 %523
    %v526 = vadd.f32 %v516, %v524
    %v527 = vtanh.pop %v526
    %529 = vrot.lane.b32.xlu0 %v527, 32
    %v530 = vpop.permute.xlu0 %529
    %v532 = vmul.f32 %v511, %v530
    %v534 = vrot.slane %v532, 4
    %535 = vrot.lane.b32.xlu0 %v534, 80
    %v536 = vpop.permute.xlu0 %535
    %v537 = vsel %vm45, %v536, 0
    %539 = vmatprep.subr.mxu0 0.0
    %540 = vmatpush1.msra.mxu0 0.0
    %541 = vmatprep.subr.mxu0 0.0
    %542 = vmatpush1.msra.mxu0 0.0
    %543 = vmatprep.subr.mxu0 0.0
    %544 = vmatpush1.msra.mxu0 0.0
    %545 = vmatprep.subr.mxu0 0.0
    %546 = vmatpush1.msra.mxu0 0.0
    %547 = vmatprep.subr.mxu0 0.0
    %548 = vmatpush1.msra.mxu0 0.0
    %549 = vmatprep.subr.mxu0 0.0
    %550 = vmatpush1.msra.mxu0 0.0
    %551 = vmatprep.subr.mxu0 0.0
    %552 = vmatpush1.msra.mxu0 0.0
    %553 = vmatprep.subr.mxu0 0.0
    %554 = vmatpush1.msra.mxu0 0.0
    %555 = vmatprep.subr.mxu0 0.0
    %556 = vmatpush1.msra.mxu0 0.0
    %557 = vmatprep.subr.mxu0 0.0
    %558 = vmatpush1.msra.mxu0 0.0
    %559 = vmatprep.subr.mxu0 0.0
    %560 = vmatpush1.msra.mxu0 0.0
    %561 = vmatprep.subr.mxu0 0.0
    %562 = vmatpush1.msra.mxu0 0.0
    %563 = vmatprep.subr.mxu0 0.0
    %564 = vmatpush1.msra.mxu0 0.0
    %565 = vmatprep.subr.mxu0 0.0
    %566 = vmatpush1.msra.mxu0 0.0
    %567 = vmatprep.subr.mxu0 0.0
    %568 = vmatpush1.msra.mxu0 %v132
    %569 = vmatprep.subr.mxu0 0.0
    %570 = vmatpush1.msra.mxu0 %v131
    %571 = vmatprep.subr.mxu0 0.0
    %572 = vmatpush2.msra.mxu0 0.0
    %573 = vmatprep.subr.mxu0 0.0
    %574 = vmatpush2.msra.mxu0 0.0
    %575 = vmatprep.subr.mxu0 0.0
    %576 = vmatpush2.msra.mxu0 0.0
    %577 = vmatprep.subr.mxu0 0.0
    %578 = vmatpush2.msra.mxu0 0.0
    %579 = vmatprep.subr.mxu0 0.0
    %580 = vmatpush2.msra.mxu0 0.0
    %581 = vmatprep.subr.mxu0 0.0
    %582 = vmatpush2.msra.mxu0 0.0
    %583 = vmatprep.subr.mxu0 0.0
    %584 = vmatpush2.msra.mxu0 0.0
    %585 = vmatprep.subr.mxu0 0.0
    %586 = vmatpush2.msra.mxu0 0.0
    %587 = vmatprep.subr.mxu0 0.0
    %588 = vmatpush2.msra.mxu0 0.0
    %589 = vmatprep.subr.mxu0 0.0
    %590 = vmatpush2.msra.mxu0 0.0
    %591 = vmatprep.subr.mxu0 0.0
    %592 = vmatpush2.msra.mxu0 0.0
    %593 = vmatprep.subr.mxu0 0.0
    %594 = vmatpush2.msra.mxu0 0.0
    %595 = vmatprep.subr.mxu0 0.0
    %596 = vmatpush2.msra.mxu0 0.0
    %597 = vmatprep.subr.mxu0 0.0
    %598 = vmatpush2.msra.mxu0 0.0
    %599 = vmatprep.subr.mxu0 0.0
    %600 = vmatpush2.msra.mxu0 0.0
    %601 = vmatprep.subr.mxu0 0.0
    %602 = vmatpush2.msra.mxu0 0.0
    %603 = vmatprep.mubr.f32.mxu0 0.0
    %604 = vmatmul.mubr.f32.gmra.mxu0 %v537
    %v605 = vpop.f32.mrf.mxu0
    %v606 = vadd.f32 0.0, %v605
    %v607 = vpop.f32.mrf.mxu0
    %608 = vdwg.mxu0
    %v610 = vrot.slane %v606, 2
    %v612 = vadd.f32 %v214, %v610
    %v613 = vxor.u32 %v612, 2147483648
    %v614 = vmul.f32 %v613, 1.442695
    %v615 = vpow.pop %v614
    %v616 = vadd.f32 %v615, 1.0
    %v617 = vrcp.pop %v616
    %v618 = vmul.f32 1.0, %v617
    %v619 = vtanh.pop %v612
    %v621 = vrot.slane %v526, 6
    %v623 = vmul.f32 %v618, %v621
    %625 = vrot.lane.b32.xlu0 %v619, 96
    %v626 = vpop.permute.xlu0 %625
    %v628 = vmul.f32 %v618, %v626
    %630 = vrot.lane.b32.xlu0 %v628, 16
    %v631 = vpop.permute.xlu0 %630
    %v633 = vadd.f32 %v623, %v631
    %v634 = vtanh.pop %v633
    %636 = vrot.lane.b32.xlu0 %v634, 32
    %v637 = vpop.permute.xlu0 %636
    %v639 = vmul.f32 %v618, %v637
    %v641 = vrot.slane %v639, 6
    %642 = vrot.lane.b32.xlu0 %v641, 80
    %v643 = vpop.permute.xlu0 %642
    %v644 = vsel %vm45, %v643, 0
    %646 = vmatprep.subr.mxu0 0.0
    %647 = vmatpush1.msra.mxu0 0.0
    %648 = vmatprep.subr.mxu0 0.0
    %649 = vmatpush1.msra.mxu0 0.0
    %650 = vmatprep.subr.mxu0 0.0
    %651 = vmatpush1.msra.mxu0 0.0
    %652 = vmatprep.subr.mxu0 0.0
    %653 = vmatpush1.msra.mxu0 0.0
    %654 = vmatprep.subr.mxu0 0.0
    %655 = vmatpush1.msra.mxu0 0.0
    %656 = vmatprep.subr.mxu0 0.0
    %657 = vmatpush1.msra.mxu0 0.0
    %658 = vmatprep.subr.mxu0 0.0
    %659 = vmatpush1.msra.mxu0 0.0
    %660 = vmatprep.subr.mxu0 0.0
    %661 = vmatpush1.msra.mxu0 0.0
    %662 = vmatprep.subr.mxu0 0.0
    %663 = vmatpush1.msra.mxu0 0.0
    %664 = vmatprep.subr.mxu0 0.0
    %665 = vmatpush1.msra.mxu0 0.0
    %666 = vmatprep.subr.mxu0 0.0
    %667 = vmatpush1.msra.mxu0 0.0
    %668 = vmatprep.subr.mxu0 0.0
    %669 = vmatpush1.msra.mxu0 0.0
    %670 = vmatprep.subr.mxu0 0.0
    %671 = vmatpush1.msra.mxu0 0.0
    %672 = vmatprep.subr.mxu0 0.0
    %673 = vmatpush1.msra.mxu0 0.0
    %674 = vmatprep.subr.mxu0 0.0
    %675 = vmatpush1.msra.mxu0 %v132
    %676 = vmatprep.subr.mxu0 0.0
    %677 = vmatpush1.msra.mxu0 %v131
    %678 = vmatprep.subr.mxu0 0.0
    %679 = vmatpush2.msra.mxu0 0.0
    %680 = vmatprep.subr.mxu0 0.0
    %681 = vmatpush2.msra.mxu0 0.0
    %682 = vmatprep.subr.mxu0 0.0
    %683 = vmatpush2.msra.mxu0 0.0
    %684 = vmatprep.subr.mxu0 0.0
    %685 = vmatpush2.msra.mxu0 0.0
    %686 = vmatprep.subr.mxu0 0.0
    %687 = vmatpush2.msra.mxu0 0.0
    %688 = vmatprep.subr.mxu0 0.0
    %689 = vmatpush2.msra.mxu0 0.0
    %690 = vmatprep.subr.mxu0 0.0
    %691 = vmatpush2.msra.mxu0 0.0
    %692 = vmatprep.subr.mxu0 0.0
    %693 = vmatpush2.msra.mxu0 0.0
    %694 = vmatprep.subr.mxu0 0.0
    %695 = vmatpush2.msra.mxu0 0.0
    %696 = vmatprep.subr.mxu0 0.0
    %697 = vmatpush2.msra.mxu0 0.0
    %698 = vmatprep.subr.mxu0 0.0
    %699 = vmatpush2.msra.mxu0 0.0
    %700 = vmatprep.subr.mxu0 0.0
    %701 = vmatpush2.msra.mxu0 0.0
    %702 = vmatprep.subr.mxu0 0.0
    %703 = vmatpush2.msra.mxu0 0.0
    %704 = vmatprep.subr.mxu0 0.0
    %705 = vmatpush2.msra.mxu0 0.0
    %706 = vmatprep.subr.mxu0 0.0
    %707 = vmatpush2.msra.mxu0 0.0
    %708 = vmatprep.subr.mxu0 0.0
    %709 = vmatpush2.msra.mxu0 0.0
    %710 = vmatprep.mubr.f32.mxu0 0.0
    %711 = vmatmul.mubr.f32.gmra.mxu0 %v644
    %v712 = vpop.f32.mrf.mxu0
    %v713 = vadd.f32 0.0, %v712
    %v714 = vpop.f32.mrf.mxu0
    %715 = vdwg.mxu0
    %v716 = vadd.f32 %v219, %v713
    %v717 = vxor.u32 %v716, 2147483648
    %v718 = vmul.f32 %v717, 1.442695
    %v719 = vpow.pop %v718
    %v720 = vadd.f32 %v719, 1.0
    %v721 = vrcp.pop %v720
    %v722 = vmul.f32 1.0, %v721
    %v723 = vtanh.pop %v716
    %v725 = vrot.slane %v633, 6
    %v727 = vmul.f32 %v722, %v725
    %729 = vrot.lane.b32.xlu0 %v723, 96
    %v730 = vpop.permute.xlu0 %729
    %v732 = vmul.f32 %v722, %v730
    %734 = vrot.lane.b32.xlu0 %v732, 16
    %v735 = vpop.permute.xlu0 %734
    %v737 = vadd.f32 %v727, %v735
    %v738 = vtanh.pop %v737
    %740 = vrot.lane.b32.xlu0 %v738, 32
    %v741 = vpop.permute.xlu0 %740
    %v743 = vmul.f32 %v722, %v741
    %745 = vrot.lane.b32.xlu0 %v743, 80
    %v746 = vpop.permute.xlu0 %745
    %v747 = vsel %vm45, %v746, 0
    %749 = vmatprep.subr.mxu0 0.0
    %750 = vmatpush1.msra.mxu0 0.0
    %751 = vmatprep.subr.mxu0 0.0
    %752 = vmatpush1.msra.mxu0 0.0
    %753 = vmatprep.subr.mxu0 0.0
    %754 = vmatpush1.msra.mxu0 0.0
    %755 = vmatprep.subr.mxu0 0.0
    %756 = vmatpush1.msra.mxu0 0.0
    %757 = vmatprep.subr.mxu0 0.0
    %758 = vmatpush1.msra.mxu0 0.0
    %759 = vmatprep.subr.mxu0 0.0
    %760 = vmatpush1.msra.mxu0 0.0
    %761 = vmatprep.subr.mxu0 0.0
    %762 = vmatpush1.msra.mxu0 0.0
    %763 = vmatprep.subr.mxu0 0.0
    %764 = vmatpush1.msra.mxu0 0.0
    %765 = vmatprep.subr.mxu0 0.0
    %766 = vmatpush1.msra.mxu0 0.0
    %767 = vmatprep.subr.mxu0 0.0
    %768 = vmatpush1.msra.mxu0 0.0
    %769 = vmatprep.subr.mxu0 0.0
    %770 = vmatpush1.msra.mxu0 0.0
    %771 = vmatprep.subr.mxu0 0.0
    %772 = vmatpush1.msra.mxu0 0.0
    %773 = vmatprep.subr.mxu0 0.0
    %774 = vmatpush1.msra.mxu0 0.0
    %775 = vmatprep.subr.mxu0 0.0
    %776 = vmatpush1.msra.mxu0 0.0
    %777 = vmatprep.subr.mxu0 0.0
    %778 = vmatpush1.msra.mxu0 %v132
    %779 = vmatprep.subr.mxu0 0.0
    %780 = vmatpush1.msra.mxu0 %v131
    %781 = vmatprep.subr.mxu0 0.0
    %782 = vmatpush2.msra.mxu0 0.0
    %783 = vmatprep.subr.mxu0 0.0
    %784 = vmatpush2.msra.mxu0 0.0
    %785 = vmatprep.subr.mxu0 0.0
    %786 = vmatpush2.msra.mxu0 0.0
    %787 = vmatprep.subr.mxu0 0.0
    %788 = vmatpush2.msra.mxu0 0.0
    %789 = vmatprep.subr.mxu0 0.0
    %790 = vmatpush2.msra.mxu0 0.0
    %791 = vmatprep.subr.mxu0 0.0
    %792 = vmatpush2.msra.mxu0 0.0
    %793 = vmatprep.subr.mxu0 0.0
    %794 = vmatpush2.msra.mxu0 0.0
    %795 = vmatprep.subr.mxu0 0.0
    %796 = vmatpush2.msra.mxu0 0.0
    %797 = vmatprep.subr.mxu0 0.0
    %798 = vmatpush2.msra.mxu0 0.0
    %799 = vmatprep.subr.mxu0 0.0
    %800 = vmatpush2.msra.mxu0 0.0
    %801 = vmatprep.subr.mxu0 0.0
    %802 = vmatpush2.msra.mxu0 0.0
    %803 = vmatprep.subr.mxu0 0.0
    %804 = vmatpush2.msra.mxu0 0.0
    %805 = vmatprep.subr.mxu0 0.0
    %806 = vmatpush2.msra.mxu0 0.0
    %807 = vmatprep.subr.mxu0 0.0
    %808 = vmatpush2.msra.mxu0 0.0
    %809 = vmatprep.subr.mxu0 0.0
    %810 = vmatpush2.msra.mxu0 0.0
    %811 = vmatprep.subr.mxu0 0.0
    %812 = vmatpush2.msra.mxu0 0.0
    %813 = vmatprep.mubr.f32.mxu0 0.0
    %814 = vmatmul.mubr.f32.gmra.mxu0 %v747
    %v815 = vpop.f32.mrf.mxu0
    %v816 = vadd.f32 0.0, %v815
    %v817 = vpop.f32.mrf.mxu0
    %818 = vdwg.mxu0
    %v820 = vrot.slane %v816, 6
    %v822 = vadd.f32 %v219, %v820
    %v823 = vxor.u32 %v822, 2147483648
    %v824 = vmul.f32 %v823, 1.442695
    %v825 = vpow.pop %v824
    %v826 = vadd.f32 %v825, 1.0
    %v827 = vrcp.pop %v826
    %v828 = vmul.f32 1.0, %v827
    %v829 = vtanh.pop %v822
    %v831 = vrot.slane %v737, 6
    %v833 = vmul.f32 %v828, %v831
    %835 = vrot.lane.b32.xlu0 %v829, 96
    %v836 = vpop.permute.xlu0 %835
    %v838 = vmul.f32 %v828, %v836
    %840 = vrot.lane.b32.xlu0 %v838, 16
    %v841 = vpop.permute.xlu0 %840
    %v843 = vadd.f32 %v833, %v841
    %v844 = vtanh.pop %v843
    %846 = vrot.lane.b32.xlu0 %v844, 32
    %v847 = vpop.permute.xlu0 %846
    %v849 = vmul.f32 %v828, %v847
    %v851 = vrot.slane %v849, 2
    %852 = vrot.lane.b32.xlu0 %v851, 80
    %v853 = vpop.permute.xlu0 %852
    %v854 = vsel %vm45, %v853, 0
    %856 = vmatprep.subr.mxu0 0.0
    %857 = vmatpush1.msra.mxu0 0.0
    %858 = vmatprep.subr.mxu0 0.0
    %859 = vmatpush1.msra.mxu0 0.0
    %860 = vmatprep.subr.mxu0 0.0
    %861 = vmatpush1.msra.mxu0 0.0
    %862 = vmatprep.subr.mxu0 0.0
    %863 = vmatpush1.msra.mxu0 0.0
    %864 = vmatprep.subr.mxu0 0.0
    %865 = vmatpush1.msra.mxu0 0.0
    %866 = vmatprep.subr.mxu0 0.0
    %867 = vmatpush1.msra.mxu0 0.0
    %868 = vmatprep.subr.mxu0 0.0
    %869 = vmatpush1.msra.mxu0 0.0
    %870 = vmatprep.subr.mxu0 0.0
    %871 = vmatpush1.msra.mxu0 0.0
    %872 = vmatprep.subr.mxu0 0.0
    %873 = vmatpush1.msra.mxu0 0.0
    %874 = vmatprep.subr.mxu0 0.0
    %875 = vmatpush1.msra.mxu0 0.0
    %876 = vmatprep.subr.mxu0 0.0
    %877 = vmatpush1.msra.mxu0 0.0
    %878 = vmatprep.subr.mxu0 0.0
    %879 = vmatpush1.msra.mxu0 0.0
    %880 = vmatprep.subr.mxu0 0.0
    %881 = vmatpush1.msra.mxu0 0.0
    %882 = vmatprep.subr.mxu0 0.0
    %883 = vmatpush1.msra.mxu0 0.0
    %884 = vmatprep.subr.mxu0 0.0
    %885 = vmatpush1.msra.mxu0 %v132
    %886 = vmatprep.subr.mxu0 0.0
    %887 = vmatpush1.msra.mxu0 %v131
    %888 = vmatprep.subr.mxu0 0.0
    %889 = vmatpush2.msra.mxu0 0.0
    %890 = vmatprep.subr.mxu0 0.0
    %891 = vmatpush2.msra.mxu0 0.0
    %892 = vmatprep.subr.mxu0 0.0
    %893 = vmatpush2.msra.mxu0 0.0
    %894 = vmatprep.subr.mxu0 0.0
    %895 = vmatpush2.msra.mxu0 0.0
    %896 = vmatprep.subr.mxu0 0.0
    %897 = vmatpush2.msra.mxu0 0.0
    %898 = vmatprep.subr.mxu0 0.0
    %899 = vmatpush2.msra.mxu0 0.0
    %900 = vmatprep.subr.mxu0 0.0
    %901 = vmatpush2.msra.mxu0 0.0
    %902 = vmatprep.subr.mxu0 0.0
    %903 = vmatpush2.msra.mxu0 0.0
    %904 = vmatprep.subr.mxu0 0.0
    %905 = vmatpush2.msra.mxu0 0.0
    %906 = vmatprep.subr.mxu0 0.0
    %907 = vmatpush2.msra.mxu0 0.0
    %908 = vmatprep.subr.mxu0 0.0
    %909 = vmatpush2.msra.mxu0 0.0
    %910 = vmatprep.subr.mxu0 0.0
    %911 = vmatpush2.msra.mxu0 0.0
    %912 = vmatprep.subr.mxu0 0.0
    %913 = vmatpush2.msra.mxu0 0.0
    %914 = vmatprep.subr.mxu0 0.0
    %915 = vmatpush2.msra.mxu0 0.0
    %916 = vmatprep.subr.mxu0 0.0
    %917 = vmatpush2.msra.mxu0 0.0
    %918 = vmatprep.subr.mxu0 0.0
    %919 = vmatpush2.msra.mxu0 0.0
    %920 = vmatprep.mubr.f32.mxu0 0.0
    %921 = vmatmul.mubr.f32.gmra.mxu0 %v854
    %v922 = vpop.f32.mrf.mxu0
    %v923 = vadd.f32 0.0, %v922
    %v924 = vpop.f32.mrf.mxu0
    %925 = vdwg.mxu0
    %v927 = vrot.slane %v923, 4
    %v929 = vadd.f32 %v219, %v927
    %v930 = vxor.u32 %v929, 2147483648
    %v931 = vmul.f32 %v930, 1.442695
    %v932 = vpow.pop %v931
    %v933 = vadd.f32 %v932, 1.0
    %v934 = vrcp.pop %v933
    %v935 = vmul.f32 1.0, %v934
    %v936 = vtanh.pop %v929
    %v938 = vrot.slane %v843, 6
    %v940 = vmul.f32 %v935, %v938
    %942 = vrot.lane.b32.xlu0 %v936, 96
    %v943 = vpop.permute.xlu0 %942
    %v945 = vmul.f32 %v935, %v943
    %947 = vrot.lane.b32.xlu0 %v945, 16
    %v948 = vpop.permute.xlu0 %947
    %v950 = vadd.f32 %v940, %v948
    %v951 = vtanh.pop %v950
    %953 = vrot.lane.b32.xlu0 %v951, 32
    %v954 = vpop.permute.xlu0 %953
    %v956 = vmul.f32 %v935, %v954
    %v958 = vrot.slane %v956, 4
    %959 = vrot.lane.b32.xlu0 %v958, 80
    %v960 = vpop.permute.xlu0 %959
    %v961 = vsel %vm45, %v960, 0
    %963 = vmatprep.subr.mxu0 0.0
    %964 = vmatpush1.msra.mxu0 0.0
    %965 = vmatprep.subr.mxu0 0.0
    %966 = vmatpush1.msra.mxu0 0.0
    %967 = vmatprep.subr.mxu0 0.0
    %968 = vmatpush1.msra.mxu0 0.0
    %969 = vmatprep.subr.mxu0 0.0
    %970 = vmatpush1.msra.mxu0 0.0
    %971 = vmatprep.subr.mxu0 0.0
    %972 = vmatpush1.msra.mxu0 0.0
    %973 = vmatprep.subr.mxu0 0.0
    %974 = vmatpush1.msra.mxu0 0.0
    %975 = vmatprep.subr.mxu0 0.0
    %976 = vmatpush1.msra.mxu0 0.0
    %977 = vmatprep.subr.mxu0 0.0
    %978 = vmatpush1.msra.mxu0 0.0
    %979 = vmatprep.subr.mxu0 0.0
    %980 = vmatpush1.msra.mxu0 0.0
    %981 = vmatprep.subr.mxu0 0.0
    %982 = vmatpush1.msra.mxu0 0.0
    %983 = vmatprep.subr.mxu0 0.0
    %984 = vmatpush1.msra.mxu0 0.0
    %985 = vmatprep.subr.mxu0 0.0
    %986 = vmatpush1.msra.mxu0 0.0
    %987 = vmatprep.subr.mxu0 0.0
    %988 = vmatpush1.msra.mxu0 0.0
    %989 = vmatprep.subr.mxu0 0.0
    %990 = vmatpush1.msra.mxu0 0.0
    %991 = vmatprep.subr.mxu0 0.0
    %992 = vmatpush1.msra.mxu0 %v132
    %993 = vmatprep.subr.mxu0 0.0
    %994 = vmatpush1.msra.mxu0 %v131
    %995 = vmatprep.subr.mxu0 0.0
    %996 = vmatpush2.msra.mxu0 0.0
    %997 = vmatprep.subr.mxu0 0.0
    %998 = vmatpush2.msra.mxu0 0.0
    %999 = vmatprep.subr.mxu0 0.0
    %1000 = vmatpush2.msra.mxu0 0.0
    %1001 = vmatprep.subr.mxu0 0.0
    %1002 = vmatpush2.msra.mxu0 0.0
    %1003 = vmatprep.subr.mxu0 0.0
    %1004 = vmatpush2.msra.mxu0 0.0
    %1005 = vmatprep.subr.mxu0 0.0
    %1006 = vmatpush2.msra.mxu0 0.0
    %1007 = vmatprep.subr.mxu0 0.0
    %1008 = vmatpush2.msra.mxu0 0.0
    %1009 = vmatprep.subr.mxu0 0.0
    %1010 = vmatpush2.msra.mxu0 0.0
    %1011 = vmatprep.subr.mxu0 0.0
    %1012 = vmatpush2.msra.mxu0 0.0
    %1013 = vmatprep.subr.mxu0 0.0
    %1014 = vmatpush2.msra.mxu0 0.0
    %1015 = vmatprep.subr.mxu0 0.0
    %1016 = vmatpush2.msra.mxu0 0.0
    %1017 = vmatprep.subr.mxu0 0.0
    %1018 = vmatpush2.msra.mxu0 0.0
    %1019 = vmatprep.subr.mxu0 0.0
    %1020 = vmatpush2.msra.mxu0 0.0
    %1021 = vmatprep.subr.mxu0 0.0
    %1022 = vmatpush2.msra.mxu0 0.0
    %1023 = vmatprep.subr.mxu0 0.0
    %1024 = vmatpush2.msra.mxu0 0.0
    %1025 = vmatprep.subr.mxu0 0.0
    %1026 = vmatpush2.msra.mxu0 0.0
    %1027 = vmatprep.mubr.f32.mxu0 0.0
    %1028 = vmatmul.mubr.f32.gmra.mxu0 %v961
    %v1029 = vpop.f32.mrf.mxu0
    %v1030 = vadd.f32 0.0, %v1029
    %v1031 = vpop.f32.mrf.mxu0
    %1032 = vdwg.mxu0
    %v1034 = vrot.slane %v1030, 2
    %v1036 = vadd.f32 %v219, %v1034
    %v1037 = vxor.u32 %v1036, 2147483648
    %v1038 = vmul.f32 %v1037, 1.442695
    %v1039 = vpow.pop %v1038
    %v1040 = vadd.f32 %v1039, 1.0
    %v1041 = vrcp.pop %v1040
    %v1042 = vmul.f32 1.0, %v1041
    %v1043 = vtanh.pop %v1036
    %v1045 = vrot.slane %v950, 6
    %v1047 = vmul.f32 %v1042, %v1045
    %1049 = vrot.lane.b32.xlu0 %v1043, 96
    %v1050 = vpop.permute.xlu0 %1049
    %v1052 = vmul.f32 %v1042, %v1050
    %1054 = vrot.lane.b32.xlu0 %v1052, 16
    %v1055 = vpop.permute.xlu0 %1054
    %v1057 = vadd.f32 %v1047, %v1055
    %v1058 = vtanh.pop %v1057
    %1060 = vrot.lane.b32.xlu0 %v1058, 32
    %v1061 = vpop.permute.xlu0 %1060
    %v1063 = vmul.f32 %v1042, %v1061
    %vm1064 = vcmask 1041408
    %v1065 = vsel %vm1064, %v319, %v425
    %vm1066 = vcmask 1043456
    %v1067 = vsel %vm1066, %v1065, %v532
    %vm1068 = vcmask 1045504
    %v1069 = vsel %vm1068, %v1067, %v639
    %v1070 = vsel %vm1064, %v743, %v849
    %v1071 = vsel %vm1066, %v1070, %v956
    %v1072 = vsel %vm1068, %v1071, %v1063
    %v1073 = vld [vmem:[%s8] sm:$0xff]
    %v1074 = vld [vmem:[%s8 + $0x8] sm:$0xff]
    %v1075 = vld [vmem:[%s9] sm:$0xff]
    %v1076 = vld [vmem:[%s9 + $0x8] sm:$0xff]
    %v1077 = vld [vmem:[%s10] sm:$0x1]
    %v1079 = vlaneseq
    %v1080 = vshrl.u32 %v1079, 7
    %v1081 = vsub.s32 0, %v1080
    %v1082 = vrot.slane %v1077, %v1081
    %1086 = vrot.lane.b32.xlu0 %v1069, 80
    %v1087 = vpop.permute.xlu0 %1086
    %1088 = vrot.lane.b32.xlu0 %v1072, 80
    %v1089 = vpop.permute.xlu0 %1088
    %v1090 = vsel %vm45, %v1087, 0
    %v1092 = vsel %vm45, %v1089, 0
    %1094 = vmatprep.subr.mxu0 0.0
    %1095 = vmatpush1.msra.mxu0 0.0
    %1096 = vmatprep.subr.mxu0 0.0
    %1097 = vmatpush1.msra.mxu0 0.0
    %1098 = vmatprep.subr.mxu0 0.0
    %1099 = vmatpush1.msra.mxu0 0.0
    %1100 = vmatprep.subr.mxu0 0.0
    %1101 = vmatpush1.msra.mxu0 0.0
    %1102 = vmatprep.subr.mxu0 0.0
    %1103 = vmatpush1.msra.mxu0 0.0
    %1104 = vmatprep.subr.mxu0 0.0
    %1105 = vmatpush1.msra.mxu0 0.0
    %1106 = vmatprep.subr.mxu0 0.0
    %1107 = vmatpush1.msra.mxu0 0.0
    %1108 = vmatprep.subr.mxu0 0.0
    %1109 = vmatpush1.msra.mxu0 0.0
    %1110 = vmatprep.subr.mxu0 0.0
    %1111 = vmatpush1.msra.mxu0 0.0
    %1112 = vmatprep.subr.mxu0 0.0
    %1113 = vmatpush1.msra.mxu0 0.0
    %1114 = vmatprep.subr.mxu0 0.0
    %1115 = vmatpush1.msra.mxu0 0.0
    %1116 = vmatprep.subr.mxu0 0.0
    %1117 = vmatpush1.msra.mxu0 0.0
    %1118 = vmatprep.subr.mxu0 0.0
    %1119 = vmatpush1.msra.mxu0 0.0
    %1120 = vmatprep.subr.mxu0 0.0
    %1121 = vmatpush1.msra.mxu0 0.0
    %1122 = vmatprep.subr.mxu0 0.0
    %1123 = vmatpush1.msra.mxu0 %v1074
    %1124 = vmatprep.subr.mxu0 0.0
    %1125 = vmatpush1.msra.mxu0 %v1073
    %1126 = vmatprep.subr.mxu0 0.0
    %1127 = vmatpush2.msra.mxu0 0.0
    %1128 = vmatprep.subr.mxu0 0.0
    %1129 = vmatpush2.msra.mxu0 0.0
    %1130 = vmatprep.subr.mxu0 0.0
    %1131 = vmatpush2.msra.mxu0 0.0
    %1132 = vmatprep.subr.mxu0 0.0
    %1133 = vmatpush2.msra.mxu0 0.0
    %1134 = vmatprep.subr.mxu0 0.0
    %1135 = vmatpush2.msra.mxu0 0.0
    %1136 = vmatprep.subr.mxu0 0.0
    %1137 = vmatpush2.msra.mxu0 0.0
    %1138 = vmatprep.subr.mxu0 0.0
    %1139 = vmatpush2.msra.mxu0 0.0
    %1140 = vmatprep.subr.mxu0 0.0
    %1141 = vmatpush2.msra.mxu0 0.0
    %1142 = vmatprep.subr.mxu0 0.0
    %1143 = vmatpush2.msra.mxu0 0.0
    %1144 = vmatprep.subr.mxu0 0.0
    %1145 = vmatpush2.msra.mxu0 0.0
    %1146 = vmatprep.subr.mxu0 0.0
    %1147 = vmatpush2.msra.mxu0 0.0
    %1148 = vmatprep.subr.mxu0 0.0
    %1149 = vmatpush2.msra.mxu0 0.0
    %1150 = vmatprep.subr.mxu0 0.0
    %1151 = vmatpush2.msra.mxu0 0.0
    %1152 = vmatprep.subr.mxu0 0.0
    %1153 = vmatpush2.msra.mxu0 0.0
    %1154 = vmatprep.subr.mxu0 0.0
    %1155 = vmatpush2.msra.mxu0 0.0
    %1156 = vmatprep.subr.mxu0 0.0
    %1157 = vmatpush2.msra.mxu0 0.0
    %1158 = vmatprep.mubr.f32.mxu0 0.0
    %1159 = vmatmul.mubr.f32.gmra.mxu0 %v1090
    %v1160 = vpop.f32.mrf.mxu0
    %v1161 = vadd.f32 %v1082, %v1160
    %v1162 = vpop.f32.mrf.mxu0
    %1163 = vmatprep.mubr.f32.mxu0 0.0
    %1164 = vmatmul.mubr.f32.gmra.mxu0 %v1092
    %v1165 = vpop.f32.mrf.mxu0
    %v1166 = vadd.f32 %v1082, %v1165
    %v1167 = vpop.f32.mrf.mxu0
    %1168 = vdwg.mxu0
    %1169 = vmatprep.subr.mxu0 0.0
    %1170 = vmatpush1.msra.mxu0 0.0
    %1171 = vmatprep.subr.mxu0 0.0
    %1172 = vmatpush1.msra.mxu0 0.0
    %1173 = vmatprep.subr.mxu0 0.0
    %1174 = vmatpush1.msra.mxu0 0.0
    %1175 = vmatprep.subr.mxu0 0.0
    %1176 = vmatpush1.msra.mxu0 0.0
    %1177 = vmatprep.subr.mxu0 0.0
    %1178 = vmatpush1.msra.mxu0 0.0
    %1179 = vmatprep.subr.mxu0 0.0
    %1180 = vmatpush1.msra.mxu0 0.0
    %1181 = vmatprep.subr.mxu0 0.0
    %1182 = vmatpush1.msra.mxu0 0.0
    %1183 = vmatprep.subr.mxu0 0.0
    %1184 = vmatpush1.msra.mxu0 0.0
    %1185 = vmatprep.subr.mxu0 0.0
    %1186 = vmatpush1.msra.mxu0 0.0
    %1187 = vmatprep.subr.mxu0 0.0
    %1188 = vmatpush1.msra.mxu0 0.0
    %1189 = vmatprep.subr.mxu0 0.0
    %1190 = vmatpush1.msra.mxu0 0.0
    %1191 = vmatprep.subr.mxu0 0.0
    %1192 = vmatpush1.msra.mxu0 0.0
    %1193 = vmatprep.subr.mxu0 0.0
    %1194 = vmatpush1.msra.mxu0 0.0
    %1195 = vmatprep.subr.mxu0 0.0
    %1196 = vmatpush1.msra.mxu0 0.0
    %1197 = vmatprep.subr.mxu0 0.0
    %1198 = vmatpush1.msra.mxu0 %v1076
    %1199 = vmatprep.subr.mxu0 0.0
    %1200 = vmatpush1.msra.mxu0 %v1075
    %1201 = vmatprep.subr.mxu0 0.0
    %1202 = vmatpush2.msra.mxu0 0.0
    %1203 = vmatprep.subr.mxu0 0.0
    %1204 = vmatpush2.msra.mxu0 0.0
    %1205 = vmatprep.subr.mxu0 0.0
    %1206 = vmatpush2.msra.mxu0 0.0
    %1207 = vmatprep.subr.mxu0 0.0
    %1208 = vmatpush2.msra.mxu0 0.0
    %1209 = vmatprep.subr.mxu0 0.0
    %1210 = vmatpush2.msra.mxu0 0.0
    %1211 = vmatprep.subr.mxu0 0.0
    %1212 = vmatpush2.msra.mxu0 0.0
    %1213 = vmatprep.subr.mxu0 0.0
    %1214 = vmatpush2.msra.mxu0 0.0
    %1215 = vmatprep.subr.mxu0 0.0
    %1216 = vmatpush2.msra.mxu0 0.0
    %1217 = vmatprep.subr.mxu0 0.0
    %1218 = vmatpush2.msra.mxu0 0.0
    %1219 = vmatprep.subr.mxu0 0.0
    %1220 = vmatpush2.msra.mxu0 0.0
    %1221 = vmatprep.subr.mxu0 0.0
    %1222 = vmatpush2.msra.mxu0 0.0
    %1223 = vmatprep.subr.mxu0 0.0
    %1224 = vmatpush2.msra.mxu0 0.0
    %1225 = vmatprep.subr.mxu0 0.0
    %1226 = vmatpush2.msra.mxu0 0.0
    %1227 = vmatprep.subr.mxu0 0.0
    %1228 = vmatpush2.msra.mxu0 0.0
    %1229 = vmatprep.subr.mxu0 0.0
    %1230 = vmatpush2.msra.mxu0 0.0
    %1231 = vmatprep.subr.mxu0 0.0
    %1232 = vmatpush2.msra.mxu0 0.0
    %1233 = vmatprep.mubr.f32.mxu0 0.0
    %1234 = vmatmul.mubr.f32.gmra.mxu0 %v223
    %v1235 = vpop.f32.mrf.mxu0
    %v1236 = vadd.f32 0.0, %v1235
    %v1237 = vpop.f32.mrf.mxu0
    %1238 = vdwg.mxu0
    %v1239 = vadd.f32 %v1161, %v1236
    %v1240 = vxor.u32 %v1239, 2147483648
    %v1241 = vmul.f32 %v1240, 1.442695
    %v1242 = vpow.pop %v1241
    %v1243 = vadd.f32 %v1242, 1.0
    %v1244 = vrcp.pop %v1243
    %v1245 = vmul.f32 1.0, %v1244
    %v1246 = vtanh.pop %v1239
    %v1247 = vmul.f32 %v1245, 0.0
    %1249 = vrot.lane.b32.xlu0 %v1246, 96
    %v1250 = vpop.permute.xlu0 %1249
    %v1252 = vmul.f32 %v1245, %v1250
    %1254 = vrot.lane.b32.xlu0 %v1252, 16
    %v1255 = vpop.permute.xlu0 %1254
    %v1257 = vadd.f32 %v1247, %v1255
    %v1258 = vtanh.pop %v1257
    %1260 = vrot.lane.b32.xlu0 %v1258, 32
    %v1261 = vpop.permute.xlu0 %1260
    %v1263 = vmul.f32 %v1245, %v1261
    %1265 = vrot.lane.b32.xlu0 %v1263, 80
    %v1266 = vpop.permute.xlu0 %1265
    %v1267 = vsel %vm45, %v1266, 0
    %1269 = vmatprep.subr.mxu0 0.0
    %1270 = vmatpush1.msra.mxu0 0.0
    %1271 = vmatprep.subr.mxu0 0.0
    %1272 = vmatpush1.msra.mxu0 0.0
    %1273 = vmatprep.subr.mxu0 0.0
    %1274 = vmatpush1.msra.mxu0 0.0
    %1275 = vmatprep.subr.mxu0 0.0
    %1276 = vmatpush1.msra.mxu0 0.0
    %1277 = vmatprep.subr.mxu0 0.0
    %1278 = vmatpush1.msra.mxu0 0.0
    %1279 = vmatprep.subr.mxu0 0.0
    %1280 = vmatpush1.msra.mxu0 0.0
    %1281 = vmatprep.subr.mxu0 0.0
    %1282 = vmatpush1.msra.mxu0 0.0
    %1283 = vmatprep.subr.mxu0 0.0
    %1284 = vmatpush1.msra.mxu0 0.0
    %1285 = vmatprep.subr.mxu0 0.0
    %1286 = vmatpush1.msra.mxu0 0.0
    %1287 = vmatprep.subr.mxu0 0.0
    %1288 = vmatpush1.msra.mxu0 0.0
    %1289 = vmatprep.subr.mxu0 0.0
    %1290 = vmatpush1.msra.mxu0 0.0
    %1291 = vmatprep.subr.mxu0 0.0
    %1292 = vmatpush1.msra.mxu0 0.0
    %1293 = vmatprep.subr.mxu0 0.0
    %1294 = vmatpush1.msra.mxu0 0.0
    %1295 = vmatprep.subr.mxu0 0.0
    %1296 = vmatpush1.msra.mxu0 0.0
    %1297 = vmatprep.subr.mxu0 0.0
    %1298 = vmatpush1.msra.mxu0 %v1076
    %1299 = vmatprep.subr.mxu0 0.0
    %1300 = vmatpush1.msra.mxu0 %v1075
    %1301 = vmatprep.subr.mxu0 0.0
    %1302 = vmatpush2.msra.mxu0 0.0
    %1303 = vmatprep.subr.mxu0 0.0
    %1304 = vmatpush2.msra.mxu0 0.0
    %1305 = vmatprep.subr.mxu0 0.0
    %1306 = vmatpush2.msra.mxu0 0.0
    %1307 = vmatprep.subr.mxu0 0.0
    %1308 = vmatpush2.msra.mxu0 0.0
    %1309 = vmatprep.subr.mxu0 0.0
    %1310 = vmatpush2.msra.mxu0 0.0
    %1311 = vmatprep.subr.mxu0 0.0
    %1312 = vmatpush2.msra.mxu0 0.0
    %1313 = vmatprep.subr.mxu0 0.0
    %1314 = vmatpush2.msra.mxu0 0.0
    %1315 = vmatprep.subr.mxu0 0.0
    %1316 = vmatpush2.msra.mxu0 0.0
    %1317 = vmatprep.subr.mxu0 0.0
    %1318 = vmatpush2.msra.mxu0 0.0
    %1319 = vmatprep.subr.mxu0 0.0
    %1320 = vmatpush2.msra.mxu0 0.0
    %1321 = vmatprep.subr.mxu0 0.0
    %1322 = vmatpush2.msra.mxu0 0.0
    %1323 = vmatprep.subr.mxu0 0.0
    %1324 = vmatpush2.msra.mxu0 0.0
    %1325 = vmatprep.subr.mxu0 0.0
    %1326 = vmatpush2.msra.mxu0 0.0
    %1327 = vmatprep.subr.mxu0 0.0
    %1328 = vmatpush2.msra.mxu0 0.0
    %1329 = vmatprep.subr.mxu0 0.0
    %1330 = vmatpush2.msra.mxu0 0.0
    %1331 = vmatprep.subr.mxu0 0.0
    %1332 = vmatpush2.msra.mxu0 0.0
    %1333 = vmatprep.mubr.f32.mxu0 0.0
    %1334 = vmatmul.mubr.f32.gmra.mxu0 %v1267
    %v1335 = vpop.f32.mrf.mxu0
    %v1336 = vadd.f32 0.0, %v1335
    %v1337 = vpop.f32.mrf.mxu0
    %1338 = vdwg.mxu0
    %v1340 = vrot.slane %v1336, 6
    %v1342 = vadd.f32 %v1161, %v1340
    %v1343 = vxor.u32 %v1342, 2147483648
    %v1344 = vmul.f32 %v1343, 1.442695
    %v1345 = vpow.pop %v1344
    %v1346 = vadd.f32 %v1345, 1.0
    %v1347 = vrcp.pop %v1346
    %v1348 = vmul.f32 1.0, %v1347
    %v1349 = vtanh.pop %v1342
    %v1351 = vrot.slane %v1257, 6
    %v1353 = vmul.f32 %v1348, %v1351
    %1355 = vrot.lane.b32.xlu0 %v1349, 96
    %v1356 = vpop.permute.xlu0 %1355
    %v1358 = vmul.f32 %v1348, %v1356
    %1360 = vrot.lane.b32.xlu0 %v1358, 16
    %v1361 = vpop.permute.xlu0 %1360
    %v1363 = vadd.f32 %v1353, %v1361
    %v1364 = vtanh.pop %v1363
    %1366 = vrot.lane.b32.xlu0 %v1364, 32
    %v1367 = vpop.permute.xlu0 %1366
    %v1369 = vmul.f32 %v1348, %v1367
    %v1371 = vrot.slane %v1369, 2
    %1372 = vrot.lane.b32.xlu0 %v1371, 80
    %v1373 = vpop.permute.xlu0 %1372
    %v1374 = vsel %vm45, %v1373, 0
    %1376 = vmatprep.subr.mxu0 0.0
    %1377 = vmatpush1.msra.mxu0 0.0
    %1378 = vmatprep.subr.mxu0 0.0
    %1379 = vmatpush1.msra.mxu0 0.0
    %1380 = vmatprep.subr.mxu0 0.0
    %1381 = vmatpush1.msra.mxu0 0.0
    %1382 = vmatprep.subr.mxu0 0.0
    %1383 = vmatpush1.msra.mxu0 0.0
    %1384 = vmatprep.subr.mxu0 0.0
    %1385 = vmatpush1.msra.mxu0 0.0
    %1386 = vmatprep.subr.mxu0 0.0
    %1387 = vmatpush1.msra.mxu0 0.0
    %1388 = vmatprep.subr.mxu0 0.0
    %1389 = vmatpush1.msra.mxu0 0.0
    %1390 = vmatprep.subr.mxu0 0.0
    %1391 = vmatpush1.msra.mxu0 0.0
    %1392 = vmatprep.subr.mxu0 0.0
    %1393 = vmatpush1.msra.mxu0 0.0
    %1394 = vmatprep.subr.mxu0 0.0
    %1395 = vmatpush1.msra.mxu0 0.0
    %1396 = vmatprep.subr.mxu0 0.0
    %1397 = vmatpush1.msra.mxu0 0.0
    %1398 = vmatprep.subr.mxu0 0.0
    %1399 = vmatpush1.msra.mxu0 0.0
    %1400 = vmatprep.subr.mxu0 0.0
    %1401 = vmatpush1.msra.mxu0 0.0
    %1402 = vmatprep.subr.mxu0 0.0
    %1403 = vmatpush1.msra.mxu0 0.0
    %1404 = vmatprep.subr.mxu0 0.0
    %1405 = vmatpush1.msra.mxu0 %v1076
    %1406 = vmatprep.subr.mxu0 0.0
    %1407 = vmatpush1.msra.mxu0 %v1075
    %1408 = vmatprep.subr.mxu0 0.0
    %1409 = vmatpush2.msra.mxu0 0.0
    %1410 = vmatprep.subr.mxu0 0.0
    %1411 = vmatpush2.msra.mxu0 0.0
    %1412 = vmatprep.subr.mxu0 0.0
    %1413 = vmatpush2.msra.mxu0 0.0
    %1414 = vmatprep.subr.mxu0 0.0
    %1415 = vmatpush2.msra.mxu0 0.0
    %1416 = vmatprep.subr.mxu0 0.0
    %1417 = vmatpush2.msra.mxu0 0.0
    %1418 = vmatprep.subr.mxu0 0.0
    %1419 = vmatpush2.msra.mxu0 0.0
    %1420 = vmatprep.subr.mxu0 0.0
    %1421 = vmatpush2.msra.mxu0 0.0
    %1422 = vmatprep.subr.mxu0 0.0
    %1423 = vmatpush2.msra.mxu0 0.0
    %1424 = vmatprep.subr.mxu0 0.0
    %1425 = vmatpush2.msra.mxu0 0.0
    %1426 = vmatprep.subr.mxu0 0.0
    %1427 = vmatpush2.msra.mxu0 0.0
    %1428 = vmatprep.subr.mxu0 0.0
    %1429 = vmatpush2.msra.mxu0 0.0
    %1430 = vmatprep.subr.mxu0 0.0
    %1431 = vmatpush2.msra.mxu0 0.0
    %1432 = vmatprep.subr.mxu0 0.0
    %1433 = vmatpush2.msra.mxu0 0.0
    %1434 = vmatprep.subr.mxu0 0.0
    %1435 = vmatpush2.msra.mxu0 0.0
    %1436 = vmatprep.subr.mxu0 0.0
    %1437 = vmatpush2.msra.mxu0 0.0
    %1438 = vmatprep.subr.mxu0 0.0
    %1439 = vmatpush2.msra.mxu0 0.0
    %1440 = vmatprep.mubr.f32.mxu0 0.0
    %1441 = vmatmul.mubr.f32.gmra.mxu0 %v1374
    %v1442 = vpop.f32.mrf.mxu0
    %v1443 = vadd.f32 0.0, %v1442
    %v1444 = vpop.f32.mrf.mxu0
    %1445 = vdwg.mxu0
    %v1447 = vrot.slane %v1443, 4
    %v1449 = vadd.f32 %v1161, %v1447
    %v1450 = vxor.u32 %v1449, 2147483648
    %v1451 = vmul.f32 %v1450, 1.442695
    %v1452 = vpow.pop %v1451
    %v1453 = vadd.f32 %v1452, 1.0
    %v1454 = vrcp.pop %v1453
    %v1455 = vmul.f32 1.0, %v1454
    %v1456 = vtanh.pop %v1449
    %v1458 = vrot.slane %v1363, 6
    %v1460 = vmul.f32 %v1455, %v1458
    %1462 = vrot.lane.b32.xlu0 %v1456, 96
    %v1463 = vpop.permute.xlu0 %1462
    %v1465 = vmul.f32 %v1455, %v1463
    %1467 = vrot.lane.b32.xlu0 %v1465, 16
    %v1468 = vpop.permute.xlu0 %1467
    %v1470 = vadd.f32 %v1460, %v1468
    %v1471 = vtanh.pop %v1470
    %1473 = vrot.lane.b32.xlu0 %v1471, 32
    %v1474 = vpop.permute.xlu0 %1473
    %v1476 = vmul.f32 %v1455, %v1474
    %v1478 = vrot.slane %v1476, 4
    %1479 = vrot.lane.b32.xlu0 %v1478, 80
    %v1480 = vpop.permute.xlu0 %1479
    %v1481 = vsel %vm45, %v1480, 0
    %1483 = vmatprep.subr.mxu0 0.0
    %1484 = vmatpush1.msra.mxu0 0.0
    %1485 = vmatprep.subr.mxu0 0.0
    %1486 = vmatpush1.msra.mxu0 0.0
    %1487 = vmatprep.subr.mxu0 0.0
    %1488 = vmatpush1.msra.mxu0 0.0
    %1489 = vmatprep.subr.mxu0 0.0
    %1490 = vmatpush1.msra.mxu0 0.0
    %1491 = vmatprep.subr.mxu0 0.0
    %1492 = vmatpush1.msra.mxu0 0.0
    %1493 = vmatprep.subr.mxu0 0.0
    %1494 = vmatpush1.msra.mxu0 0.0
    %1495 = vmatprep.subr.mxu0 0.0
    %1496 = vmatpush1.msra.mxu0 0.0
    %1497 = vmatprep.subr.mxu0 0.0
    %1498 = vmatpush1.msra.mxu0 0.0
    %1499 = vmatprep.subr.mxu0 0.0
    %1500 = vmatpush1.msra.mxu0 0.0
    %1501 = vmatprep.subr.mxu0 0.0
    %1502 = vmatpush1.msra.mxu0 0.0
    %1503 = vmatprep.subr.mxu0 0.0
    %1504 = vmatpush1.msra.mxu0 0.0
    %1505 = vmatprep.subr.mxu0 0.0
    %1506 = vmatpush1.msra.mxu0 0.0
    %1507 = vmatprep.subr.mxu0 0.0
    %1508 = vmatpush1.msra.mxu0 0.0
    %1509 = vmatprep.subr.mxu0 0.0
    %1510 = vmatpush1.msra.mxu0 0.0
    %1511 = vmatprep.subr.mxu0 0.0
    %1512 = vmatpush1.msra.mxu0 %v1076
    %1513 = vmatprep.subr.mxu0 0.0
    %1514 = vmatpush1.msra.mxu0 %v1075
    %1515 = vmatprep.subr.mxu0 0.0
    %1516 = vmatpush2.msra.mxu0 0.0
    %1517 = vmatprep.subr.mxu0 0.0
    %1518 = vmatpush2.msra.mxu0 0.0
    %1519 = vmatprep.subr.mxu0 0.0
    %1520 = vmatpush2.msra.mxu0 0.0
    %1521 = vmatprep.subr.mxu0 0.0
    %1522 = vmatpush2.msra.mxu0 0.0
    %1523 = vmatprep.subr.mxu0 0.0
    %1524 = vmatpush2.msra.mxu0 0.0
    %1525 = vmatprep.subr.mxu0 0.0
    %1526 = vmatpush2.msra.mxu0 0.0
    %1527 = vmatprep.subr.mxu0 0.0
    %1528 = vmatpush2.msra.mxu0 0.0
    %1529 = vmatprep.subr.mxu0 0.0
    %1530 = vmatpush2.msra.mxu0 0.0
    %1531 = vmatprep.subr.mxu0 0.0
    %1532 = vmatpush2.msra.mxu0 0.0
    %1533 = vmatprep.subr.mxu0 0.0
    %1534 = vmatpush2.msra.mxu0 0.0
    %1535 = vmatprep.subr.mxu0 0.0
    %1536 = vmatpush2.msra.mxu0 0.0
    %1537 = vmatprep.subr.mxu0 0.0
    %1538 = vmatpush2.msra.mxu0 0.0
    %1539 = vmatprep.subr.mxu0 0.0
    %1540 = vmatpush2.msra.mxu0 0.0
    %1541 = vmatprep.subr.mxu0 0.0
    %1542 = vmatpush2.msra.mxu0 0.0
    %1543 = vmatprep.subr.mxu0 0.0
    %1544 = vmatpush2.msra.mxu0 0.0
    %1545 = vmatprep.subr.mxu0 0.0
    %1546 = vmatpush2.msra.mxu0 0.0
    %1547 = vmatprep.mubr.f32.mxu0 0.0
    %1548 = vmatmul.mubr.f32.gmra.mxu0 %v1481
    %v1549 = vpop.f32.mrf.mxu0
    %v1550 = vadd.f32 0.0, %v1549
    %v1551 = vpop.f32.mrf.mxu0
    %1552 = vdwg.mxu0
    %v1554 = vrot.slane %v1550, 2
    %v1556 = vadd.f32 %v1161, %v1554
    %v1557 = vxor.u32 %v1556, 2147483648
    %v1558 = vmul.f32 %v1557, 1.442695
    %v1559 = vpow.pop %v1558
    %v1560 = vadd.f32 %v1559, 1.0
    %v1561 = vrcp.pop %v1560
    %v1562 = vmul.f32 1.0, %v1561
    %v1563 = vtanh.pop %v1556
    %v1565 = vrot.slane %v1470, 6
    %v1567 = vmul.f32 %v1562, %v1565
    %1569 = vrot.lane.b32.xlu0 %v1563, 96
    %v1570 = vpop.permute.xlu0 %1569
    %v1572 = vmul.f32 %v1562, %v1570
    %1574 = vrot.lane.b32.xlu0 %v1572, 16
    %v1575 = vpop.permute.xlu0 %1574
    %v1577 = vadd.f32 %v1567, %v1575
    %v1578 = vtanh.pop %v1577
    %1580 = vrot.lane.b32.xlu0 %v1578, 32
    %v1581 = vpop.permute.xlu0 %1580
    %v1583 = vmul.f32 %v1562, %v1581
    %v1585 = vrot.slane %v1583, 6
    %1586 = vrot.lane.b32.xlu0 %v1585, 80
    %v1587 = vpop.permute.xlu0 %1586
    %v1588 = vsel %vm45, %v1587, 0
    %1590 = vmatprep.subr.mxu0 0.0
    %1591 = vmatpush1.msra.mxu0 0.0
    %1592 = vmatprep.subr.mxu0 0.0
    %1593 = vmatpush1.msra.mxu0 0.0
    %1594 = vmatprep.subr.mxu0 0.0
    %1595 = vmatpush1.msra.mxu0 0.0
    %1596 = vmatprep.subr.mxu0 0.0
    %1597 = vmatpush1.msra.mxu0 0.0
    %1598 = vmatprep.subr.mxu0 0.0
    %1599 = vmatpush1.msra.mxu0 0.0
    %1600 = vmatprep.subr.mxu0 0.0
    %1601 = vmatpush1.msra.mxu0 0.0
    %1602 = vmatprep.subr.mxu0 0.0
    %1603 = vmatpush1.msra.mxu0 0.0
    %1604 = vmatprep.subr.mxu0 0.0
    %1605 = vmatpush1.msra.mxu0 0.0
    %1606 = vmatprep.subr.mxu0 0.0
    %1607 = vmatpush1.msra.mxu0 0.0
    %1608 = vmatprep.subr.mxu0 0.0
    %1609 = vmatpush1.msra.mxu0 0.0
    %1610 = vmatprep.subr.mxu0 0.0
    %1611 = vmatpush1.msra.mxu0 0.0
    %1612 = vmatprep.subr.mxu0 0.0
    %1613 = vmatpush1.msra.mxu0 0.0
    %1614 = vmatprep.subr.mxu0 0.0
    %1615 = vmatpush1.msra.mxu0 0.0
    %1616 = vmatprep.subr.mxu0 0.0
    %1617 = vmatpush1.msra.mxu0 0.0
    %1618 = vmatprep.subr.mxu0 0.0
    %1619 = vmatpush1.msra.mxu0 %v1076
    %1620 = vmatprep.subr.mxu0 0.0
    %1621 = vmatpush1.msra.mxu0 %v1075
    %1622 = vmatprep.subr.mxu0 0.0
    %1623 = vmatpush2.msra.mxu0 0.0
    %1624 = vmatprep.subr.mxu0 0.0
    %1625 = vmatpush2.msra.mxu0 0.0
    %1626 = vmatprep.subr.mxu0 0.0
    %1627 = vmatpush2.msra.mxu0 0.0
    %1628 = vmatprep.subr.mxu0 0.0
    %1629 = vmatpush2.msra.mxu0 0.0
    %1630 = vmatprep.subr.mxu0 0.0
    %1631 = vmatpush2.msra.mxu0 0.0
    %1632 = vmatprep.subr.mxu0 0.0
    %1633 = vmatpush2.msra.mxu0 0.0
    %1634 = vmatprep.subr.mxu0 0.0
    %1635 = vmatpush2.msra.mxu0 0.0
    %1636 = vmatprep.subr.mxu0 0.0
    %1637 = vmatpush2.msra.mxu0 0.0
    %1638 = vmatprep.subr.mxu0 0.0
    %1639 = vmatpush2.msra.mxu0 0.0
    %1640 = vmatprep.subr.mxu0 0.0
    %1641 = vmatpush2.msra.mxu0 0.0
    %1642 = vmatprep.subr.mxu0 0.0
    %1643 = vmatpush2.msra.mxu0 0.0
    %1644 = vmatprep.subr.mxu0 0.0
    %1645 = vmatpush2.msra.mxu0 0.0
    %1646 = vmatprep.subr.mxu0 0.0
    %1647 = vmatpush2.msra.mxu0 0.0
    %1648 = vmatprep.subr.mxu0 0.0
    %1649 = vmatpush2.msra.mxu0 0.0
    %1650 = vmatprep.subr.mxu0 0.0
    %1651 = vmatpush2.msra.mxu0 0.0
    %1652 = vmatprep.subr.mxu0 0.0
    %1653 = vmatpush2.msra.mxu0 0.0
    %1654 = vmatprep.mubr.f32.mxu0 0.0
    %1655 = vmatmul.mubr.f32.gmra.mxu0 %v1588
    %v1656 = vpop.f32.mrf.mxu0
    %v1657 = vadd.f32 0.0, %v1656
    %v1658 = vpop.f32.mrf.mxu0
    %1659 = vdwg.mxu0
    %v1660 = vadd.f32 %v1166, %v1657
    %v1661 = vxor.u32 %v1660, 2147483648
    %v1662 = vmul.f32 %v1661, 1.442695
    %v1663 = vpow.pop %v1662
    %v1664 = vadd.f32 %v1663, 1.0
    %v1665 = vrcp.pop %v1664
    %v1666 = vmul.f32 1.0, %v1665
    %v1667 = vtanh.pop %v1660
    %v1669 = vrot.slane %v1577, 6
    %v1671 = vmul.f32 %v1666, %v1669
    %1673 = vrot.lane.b32.xlu0 %v1667, 96
    %v1674 = vpop.permute.xlu0 %1673
    %v1676 = vmul.f32 %v1666, %v1674
    %1678 = vrot.lane.b32.xlu0 %v1676, 16
    %v1679 = vpop.permute.xlu0 %1678
    %v1681 = vadd.f32 %v1671, %v1679
    %v1682 = vtanh.pop %v1681
    %1684 = vrot.lane.b32.xlu0 %v1682, 32
    %v1685 = vpop.permute.xlu0 %1684
    %v1687 = vmul.f32 %v1666, %v1685
    %1689 = vrot.lane.b32.xlu0 %v1687, 80
    %v1690 = vpop.permute.xlu0 %1689
    %v1691 = vsel %vm45, %v1690, 0
    %1693 = vmatprep.subr.mxu0 0.0
    %1694 = vmatpush1.msra.mxu0 0.0
    %1695 = vmatprep.subr.mxu0 0.0
    %1696 = vmatpush1.msra.mxu0 0.0
    %1697 = vmatprep.subr.mxu0 0.0
    %1698 = vmatpush1.msra.mxu0 0.0
    %1699 = vmatprep.subr.mxu0 0.0
    %1700 = vmatpush1.msra.mxu0 0.0
    %1701 = vmatprep.subr.mxu0 0.0
    %1702 = vmatpush1.msra.mxu0 0.0
    %1703 = vmatprep.subr.mxu0 0.0
    %1704 = vmatpush1.msra.mxu0 0.0
    %1705 = vmatprep.subr.mxu0 0.0
    %1706 = vmatpush1.msra.mxu0 0.0
    %1707 = vmatprep.subr.mxu0 0.0
    %1708 = vmatpush1.msra.mxu0 0.0
    %1709 = vmatprep.subr.mxu0 0.0
    %1710 = vmatpush1.msra.mxu0 0.0
    %1711 = vmatprep.subr.mxu0 0.0
    %1712 = vmatpush1.msra.mxu0 0.0
    %1713 = vmatprep.subr.mxu0 0.0
    %1714 = vmatpush1.msra.mxu0 0.0
    %1715 = vmatprep.subr.mxu0 0.0
    %1716 = vmatpush1.msra.mxu0 0.0
    %1717 = vmatprep.subr.mxu0 0.0
    %1718 = vmatpush1.msra.mxu0 0.0
    %1719 = vmatprep.subr.mxu0 0.0
    %1720 = vmatpush1.msra.mxu0 0.0
    %1721 = vmatprep.subr.mxu0 0.0
    %1722 = vmatpush1.msra.mxu0 %v1076
    %1723 = vmatprep.subr.mxu0 0.0
    %1724 = vmatpush1.msra.mxu0 %v1075
    %1725 = vmatprep.subr.mxu0 0.0
    %1726 = vmatpush2.msra.mxu0 0.0
    %1727 = vmatprep.subr.mxu0 0.0
    %1728 = vmatpush2.msra.mxu0 0.0
    %1729 = vmatprep.subr.mxu0 0.0
    %1730 = vmatpush2.msra.mxu0 0.0
    %1731 = vmatprep.subr.mxu0 0.0
    %1732 = vmatpush2.msra.mxu0 0.0
    %1733 = vmatprep.subr.mxu0 0.0
    %1734 = vmatpush2.msra.mxu0 0.0
    %1735 = vmatprep.subr.mxu0 0.0
    %1736 = vmatpush2.msra.mxu0 0.0
    %1737 = vmatprep.subr.mxu0 0.0
    %1738 = vmatpush2.msra.mxu0 0.0
    %1739 = vmatprep.subr.mxu0 0.0
    %1740 = vmatpush2.msra.mxu0 0.0
    %1741 = vmatprep.subr.mxu0 0.0
    %1742 = vmatpush2.msra.mxu0 0.0
    %1743 = vmatprep.subr.mxu0 0.0
    %1744 = vmatpush2.msra.mxu0 0.0
    %1745 = vmatprep.subr.mxu0 0.0
    %1746 = vmatpush2.msra.mxu0 0.0
    %1747 = vmatprep.subr.mxu0 0.0
    %1748 = vmatpush2.msra.mxu0 0.0
    %1749 = vmatprep.subr.mxu0 0.0
    %1750 = vmatpush2.msra.mxu0 0.0
    %1751 = vmatprep.subr.mxu0 0.0
    %1752 = vmatpush2.msra.mxu0 0.0
    %1753 = vmatprep.subr.mxu0 0.0
    %1754 = vmatpush2.msra.mxu0 0.0
    %1755 = vmatprep.subr.mxu0 0.0
    %1756 = vmatpush2.msra.mxu0 0.0
    %1757 = vmatprep.mubr.f32.mxu0 0.0
    %1758 = vmatmul.mubr.f32.gmra.mxu0 %v1691
    %v1759 = vpop.f32.mrf.mxu0
    %v1760 = vadd.f32 0.0, %v1759
    %v1761 = vpop.f32.mrf.mxu0
    %1762 = vdwg.mxu0
    %v1764 = vrot.slane %v1760, 6
    %v1766 = vadd.f32 %v1166, %v1764
    %v1767 = vxor.u32 %v1766, 2147483648
    %v1768 = vmul.f32 %v1767, 1.442695
    %v1769 = vpow.pop %v1768
    %v1770 = vadd.f32 %v1769, 1.0
    %v1771 = vrcp.pop %v1770
    %v1772 = vmul.f32 1.0, %v1771
    %v1773 = vtanh.pop %v1766
    %v1775 = vrot.slane %v1681, 6
    %v1777 = vmul.f32 %v1772, %v1775
    %1779 = vrot.lane.b32.xlu0 %v1773, 96
    %v1780 = vpop.permute.xlu0 %1779
    %v1782 = vmul.f32 %v1772, %v1780
    %1784 = vrot.lane.b32.xlu0 %v1782, 16
    %v1785 = vpop.permute.xlu0 %1784
    %v1787 = vadd.f32 %v1777, %v1785
    %v1788 = vtanh.pop %v1787
    %1790 = vrot.lane.b32.xlu0 %v1788, 32
    %v1791 = vpop.permute.xlu0 %1790
    %v1793 = vmul.f32 %v1772, %v1791
    %v1795 = vrot.slane %v1793, 2
    %1796 = vrot.lane.b32.xlu0 %v1795, 80
    %v1797 = vpop.permute.xlu0 %1796
    %v1798 = vsel %vm45, %v1797, 0
    %1800 = vmatprep.subr.mxu0 0.0
    %1801 = vmatpush1.msra.mxu0 0.0
    %1802 = vmatprep.subr.mxu0 0.0
    %1803 = vmatpush1.msra.mxu0 0.0
    %1804 = vmatprep.subr.mxu0 0.0
    %1805 = vmatpush1.msra.mxu0 0.0
    %1806 = vmatprep.subr.mxu0 0.0
    %1807 = vmatpush1.msra.mxu0 0.0
    %1808 = vmatprep.subr.mxu0 0.0
    %1809 = vmatpush1.msra.mxu0 0.0
    %1810 = vmatprep.subr.mxu0 0.0
    %1811 = vmatpush1.msra.mxu0 0.0
    %1812 = vmatprep.subr.mxu0 0.0
    %1813 = vmatpush1.msra.mxu0 0.0
    %1814 = vmatprep.subr.mxu0 0.0
    %1815 = vmatpush1.msra.mxu0 0.0
    %1816 = vmatprep.subr.mxu0 0.0
    %1817 = vmatpush1.msra.mxu0 0.0
    %1818 = vmatprep.subr.mxu0 0.0
    %1819 = vmatpush1.msra.mxu0 0.0
    %1820 = vmatprep.subr.mxu0 0.0
    %1821 = vmatpush1.msra.mxu0 0.0
    %1822 = vmatprep.subr.mxu0 0.0
    %1823 = vmatpush1.msra.mxu0 0.0
    %1824 = vmatprep.subr.mxu0 0.0
    %1825 = vmatpush1.msra.mxu0 0.0
    %1826 = vmatprep.subr.mxu0 0.0
    %1827 = vmatpush1.msra.mxu0 0.0
    %1828 = vmatprep.subr.mxu0 0.0
    %1829 = vmatpush1.msra.mxu0 %v1076
    %1830 = vmatprep.subr.mxu0 0.0
    %1831 = vmatpush1.msra.mxu0 %v1075
    %1832 = vmatprep.subr.mxu0 0.0
    %1833 = vmatpush2.msra.mxu0 0.0
    %1834 = vmatprep.subr.mxu0 0.0
    %1835 = vmatpush2.msra.mxu0 0.0
    %1836 = vmatprep.subr.mxu0 0.0
    %1837 = vmatpush2.msra.mxu0 0.0
    %1838 = vmatprep.subr.mxu0 0.0
    %1839 = vmatpush2.msra.mxu0 0.0
    %1840 = vmatprep.subr.mxu0 0.0
    %1841 = vmatpush2.msra.mxu0 0.0
    %1842 = vmatprep.subr.mxu0 0.0
    %1843 = vmatpush2.msra.mxu0 0.0
    %1844 = vmatprep.subr.mxu0 0.0
    %1845 = vmatpush2.msra.mxu0 0.0
    %1846 = vmatprep.subr.mxu0 0.0
    %1847 = vmatpush2.msra.mxu0 0.0
    %1848 = vmatprep.subr.mxu0 0.0
    %1849 = vmatpush2.msra.mxu0 0.0
    %1850 = vmatprep.subr.mxu0 0.0
    %1851 = vmatpush2.msra.mxu0 0.0
    %1852 = vmatprep.subr.mxu0 0.0
    %1853 = vmatpush2.msra.mxu0 0.0
    %1854 = vmatprep.subr.mxu0 0.0
    %1855 = vmatpush2.msra.mxu0 0.0
    %1856 = vmatprep.subr.mxu0 0.0
    %1857 = vmatpush2.msra.mxu0 0.0
    %1858 = vmatprep.subr.mxu0 0.0
    %1859 = vmatpush2.msra.mxu0 0.0
    %1860 = vmatprep.subr.mxu0 0.0
    %1861 = vmatpush2.msra.mxu0 0.0
    %1862 = vmatprep.subr.mxu0 0.0
    %1863 = vmatpush2.msra.mxu0 0.0
    %1864 = vmatprep.mubr.f32.mxu0 0.0
    %1865 = vmatmul.mubr.f32.gmra.mxu0 %v1798
    %v1866 = vpop.f32.mrf.mxu0
    %v1867 = vadd.f32 0.0, %v1866
    %v1868 = vpop.f32.mrf.mxu0
    %1869 = vdwg.mxu0
    %v1871 = vrot.slane %v1867, 4
    %v1873 = vadd.f32 %v1166, %v1871
    %v1874 = vxor.u32 %v1873, 2147483648
    %v1875 = vmul.f32 %v1874, 1.442695
    %v1876 = vpow.pop %v1875
    %v1877 = vadd.f32 %v1876, 1.0
    %v1878 = vrcp.pop %v1877
    %v1879 = vmul.f32 1.0, %v1878
    %v1880 = vtanh.pop %v1873
    %v1882 = vrot.slane %v1787, 6
    %v1884 = vmul.f32 %v1879, %v1882
    %1886 = vrot.lane.b32.xlu0 %v1880, 96
    %v1887 = vpop.permute.xlu0 %1886
    %v1889 = vmul.f32 %v1879, %v1887
    %1891 = vrot.lane.b32.xlu0 %v1889, 16
    %v1892 = vpop.permute.xlu0 %1891
    %v1894 = vadd.f32 %v1884, %v1892
    %v1895 = vtanh.pop %v1894
    %1897 = vrot.lane.b32.xlu0 %v1895, 32
    %v1898 = vpop.permute.xlu0 %1897
    %v1900 = vmul.f32 %v1879, %v1898
    %v1902 = vrot.slane %v1900, 4
    %1903 = vrot.lane.b32.xlu0 %v1902, 80
    %v1904 = vpop.permute.xlu0 %1903
    %v1905 = vsel %vm45, %v1904, 0
    %1907 = vmatprep.subr.mxu0 0.0
    %1908 = vmatpush1.msra.mxu0 0.0
    %1909 = vmatprep.subr.mxu0 0.0
    %1910 = vmatpush1.msra.mxu0 0.0
    %1911 = vmatprep.subr.mxu0 0.0
    %1912 = vmatpush1.msra.mxu0 0.0
    %1913 = vmatprep.subr.mxu0 0.0
    %1914 = vmatpush1.msra.mxu0 0.0
    %1915 = vmatprep.subr.mxu0 0.0
    %1916 = vmatpush1.msra.mxu0 0.0
    %1917 = vmatprep.subr.mxu0 0.0
    %1918 = vmatpush1.msra.mxu0 0.0
    %1919 = vmatprep.subr.mxu0 0.0
    %1920 = vmatpush1.msra.mxu0 0.0
    %1921 = vmatprep.subr.mxu0 0.0
    %1922 = vmatpush1.msra.mxu0 0.0
    %1923 = vmatprep.subr.mxu0 0.0
    %1924 = vmatpush1.msra.mxu0 0.0
    %1925 = vmatprep.subr.mxu0 0.0
    %1926 = vmatpush1.msra.mxu0 0.0
    %1927 = vmatprep.subr.mxu0 0.0
    %1928 = vmatpush1.msra.mxu0 0.0
    %1929 = vmatprep.subr.mxu0 0.0
    %1930 = vmatpush1.msra.mxu0 0.0
    %1931 = vmatprep.subr.mxu0 0.0
    %1932 = vmatpush1.msra.mxu0 0.0
    %1933 = vmatprep.subr.mxu0 0.0
    %1934 = vmatpush1.msra.mxu0 0.0
    %1935 = vmatprep.subr.mxu0 0.0
    %1936 = vmatpush1.msra.mxu0 %v1076
    %1937 = vmatprep.subr.mxu0 0.0
    %1938 = vmatpush1.msra.mxu0 %v1075
    %1939 = vmatprep.subr.mxu0 0.0
    %1940 = vmatpush2.msra.mxu0 0.0
    %1941 = vmatprep.subr.mxu0 0.0
    %1942 = vmatpush2.msra.mxu0 0.0
    %1943 = vmatprep.subr.mxu0 0.0
    %1944 = vmatpush2.msra.mxu0 0.0
    %1945 = vmatprep.subr.mxu0 0.0
    %1946 = vmatpush2.msra.mxu0 0.0
    %1947 = vmatprep.subr.mxu0 0.0
    %1948 = vmatpush2.msra.mxu0 0.0
    %1949 = vmatprep.subr.mxu0 0.0
    %1950 = vmatpush2.msra.mxu0 0.0
    %1951 = vmatprep.subr.mxu0 0.0
    %1952 = vmatpush2.msra.mxu0 0.0
    %1953 = vmatprep.subr.mxu0 0.0
    %1954 = vmatpush2.msra.mxu0 0.0
    %1955 = vmatprep.subr.mxu0 0.0
    %1956 = vmatpush2.msra.mxu0 0.0
    %1957 = vmatprep.subr.mxu0 0.0
    %1958 = vmatpush2.msra.mxu0 0.0
    %1959 = vmatprep.subr.mxu0 0.0
    %1960 = vmatpush2.msra.mxu0 0.0
    %1961 = vmatprep.subr.mxu0 0.0
    %1962 = vmatpush2.msra.mxu0 0.0
    %1963 = vmatprep.subr.mxu0 0.0
    %1964 = vmatpush2.msra.mxu0 0.0
    %1965 = vmatprep.subr.mxu0 0.0
    %1966 = vmatpush2.msra.mxu0 0.0
    %1967 = vmatprep.subr.mxu0 0.0
    %1968 = vmatpush2.msra.mxu0 0.0
    %1969 = vmatprep.subr.mxu0 0.0
    %1970 = vmatpush2.msra.mxu0 0.0
    %1971 = vmatprep.mubr.f32.mxu0 0.0
    %1972 = vmatmul.mubr.f32.gmra.mxu0 %v1905
    %v1973 = vpop.f32.mrf.mxu0
    %v1974 = vadd.f32 0.0, %v1973
    %v1975 = vpop.f32.mrf.mxu0
    %1976 = vdwg.mxu0
    %v1978 = vrot.slane %v1974, 2
    %v1980 = vadd.f32 %v1166, %v1978
    %v1981 = vxor.u32 %v1980, 2147483648
    %v1982 = vmul.f32 %v1981, 1.442695
    %v1983 = vpow.pop %v1982
    %v1984 = vadd.f32 %v1983, 1.0
    %v1985 = vrcp.pop %v1984
    %v1986 = vmul.f32 1.0, %v1985
    %v1987 = vtanh.pop %v1980
    %v1989 = vrot.slane %v1894, 6
    %v1991 = vmul.f32 %v1986, %v1989
    %1993 = vrot.lane.b32.xlu0 %v1987, 96
    %v1994 = vpop.permute.xlu0 %1993
    %v1996 = vmul.f32 %v1986, %v1994
    %1998 = vrot.lane.b32.xlu0 %v1996, 16
    %v1999 = vpop.permute.xlu0 %1998
    %v2001 = vadd.f32 %v1991, %v1999
    %v2002 = vtanh.pop %v2001
    %2004 = vrot.lane.b32.xlu0 %v2002, 32
    %v2005 = vpop.permute.xlu0 %2004
    %v2007 = vmul.f32 %v1986, %v2005
    %v2008 = vld [vmem:[%s3] sm:$0xff]
    %v2009 = vld [vmem:[%s4] sm:$0xff]
    %v2010 = vrot.slane %v1369, 1
    %v2012 = vrot.slane %v1476, 2
    %v2014 = vrot.slane %v1583, 3
    %v2016 = vrot.slane %v1687, 4
    %v2018 = vrot.slane %v1793, 5
    %v2020 = vrot.slane %v1900, 6
    %v2023 = vrot.slane %v2007, 7
    %vm2025 = vcmask 1040384
    %v2026 = vsel %vm2025, %v1263, %v2010
    %v2027 = vsel %vm1064, %v2026, %v2012
    %vm2028 = vcmask 1042432
    %v2029 = vsel %vm2028, %v2027, %v2014
    %v2030 = vsel %vm1066, %v2029, %v2016
    %vm2031 = vcmask 1044480
    %v2032 = vsel %vm2031, %v2030, %v2018
    %v2033 = vsel %vm1068, %v2032, %v2020
    %vm2034 = vcmask 1046528
    %v2035 = vsel %vm2034, %v2033, %v2023
    %2037 = vset.pattern.permute.xlu0 0
    %2038 = vperm.xlu0 %2037, %v2009
    %v2039 = vpop.permute.xlu0 %2038
    %2042 = vrot.lane.b32.xlu0 %v2035, 80
    %v2043 = vpop.permute.xlu0 %2042
    %vm2045 = vcmask 64512
    %v2047 = vsel %vm2045, %v2008, 0
    %2049 = vmatprep.subr.mxu0 0.0
    %2050 = vmatpush1.msra.mxu0 0.0
    %2051 = vmatprep.subr.mxu0 0.0
    %2052 = vmatpush1.msra.mxu0 0.0
    %2053 = vmatprep.subr.mxu0 0.0
    %2054 = vmatpush1.msra.mxu0 0.0
    %2055 = vmatprep.subr.mxu0 0.0
    %2056 = vmatpush1.msra.mxu0 0.0
    %2057 = vmatprep.subr.mxu0 0.0
    %2058 = vmatpush1.msra.mxu0 0.0
    %2059 = vmatprep.subr.mxu0 0.0
    %2060 = vmatpush1.msra.mxu0 0.0
    %2061 = vmatprep.subr.mxu0 0.0
    %2062 = vmatpush1.msra.mxu0 0.0
    %2063 = vmatprep.subr.mxu0 0.0
    %2064 = vmatpush1.msra.mxu0 0.0
    %2065 = vmatprep.subr.mxu0 0.0
    %2066 = vmatpush1.msra.mxu0 0.0
    %2067 = vmatprep.subr.mxu0 0.0
    %2068 = vmatpush1.msra.mxu0 0.0
    %2069 = vmatprep.subr.mxu0 0.0
    %2070 = vmatpush1.msra.mxu0 0.0
    %2071 = vmatprep.subr.mxu0 0.0
    %2072 = vmatpush1.msra.mxu0 0.0
    %2073 = vmatprep.subr.mxu0 0.0
    %2074 = vmatpush1.msra.mxu0 0.0
    %2075 = vmatprep.subr.mxu0 0.0
    %2076 = vmatpush1.msra.mxu0 0.0
    %2077 = vmatprep.subr.mxu0 0.0
    %2078 = vmatpush1.msra.mxu0 0.0
    %2079 = vmatprep.subr.mxu0 0.0
    %2080 = vmatpush1.msra.mxu0 %v2043
    %2081 = vmatprep.subr.mxu0 0.0
    %2082 = vmatpush2.msra.mxu0 0.0
    %2083 = vmatprep.subr.mxu0 0.0
    %2084 = vmatpush2.msra.mxu0 0.0
    %2085 = vmatprep.subr.mxu0 0.0
    %2086 = vmatpush2.msra.mxu0 0.0
    %2087 = vmatprep.subr.mxu0 0.0
    %2088 = vmatpush2.msra.mxu0 0.0
    %2089 = vmatprep.subr.mxu0 0.0
    %2090 = vmatpush2.msra.mxu0 0.0
    %2091 = vmatprep.subr.mxu0 0.0
    %2092 = vmatpush2.msra.mxu0 0.0
    %2093 = vmatprep.subr.mxu0 0.0
    %2094 = vmatpush2.msra.mxu0 0.0
    %2095 = vmatprep.subr.mxu0 0.0
    %2096 = vmatpush2.msra.mxu0 0.0
    %2097 = vmatprep.subr.mxu0 0.0
    %2098 = vmatpush2.msra.mxu0 0.0
    %2099 = vmatprep.subr.mxu0 0.0
    %2100 = vmatpush2.msra.mxu0 0.0
    %2101 = vmatprep.subr.mxu0 0.0
    %2102 = vmatpush2.msra.mxu0 0.0
    %2103 = vmatprep.subr.mxu0 0.0
    %2104 = vmatpush2.msra.mxu0 0.0
    %2105 = vmatprep.subr.mxu0 0.0
    %2106 = vmatpush2.msra.mxu0 0.0
    %2107 = vmatprep.subr.mxu0 0.0
    %2108 = vmatpush2.msra.mxu0 0.0
    %2109 = vmatprep.subr.mxu0 0.0
    %2110 = vmatpush2.msra.mxu0 0.0
    %2111 = vmatprep.subr.mxu0 0.0
    %2112 = vmatpush2.msra.mxu0 0.0
    %2113 = vmatprep.mubr.f32.mxu0 0.0
    %2114 = vmatmul.mubr.f32.gmra.mxu0 %v2047
    %v2115 = vpop.f32.mrf.mxu0
    %v2116 = vadd.f32 %v2039, %v2115
    %v2117 = vpop.f32.mrf.mxu0
    %2118 = vdwg.mxu0
    %2119 = vst.msk [vmem:[#allocation2] sm:$0xff] %vm45, %v2116
    %v2120 = vrot.slane %v1263, 1
    %v2123 = vrot.slane %v1476, 3
    %v2125 = vrot.slane %v1583, 4
    %v2127 = vrot.slane %v1687, 5
    %v2129 = vrot.slane %v1793, 6
    %v2131 = vrot.slane %v1900, 7
    %v2133 = vsel %vm2025, %v2120, %v1371
    %v2134 = vsel %vm1064, %v2133, %v2123
    %v2135 = vsel %vm2028, %v2134, %v2125
    %v2136 = vsel %vm1066, %v2135, %v2127
    %v2137 = vsel %vm2031, %v2136, %v2129
    %v2138 = vsel %vm1068, %v2137, %v2131
    %v2139 = vsel %vm2034, %v2138, %v2007
    %2141 = vrot.lane.b32.xlu0 %v2139, 80
    %v2142 = vpop.permute.xlu0 %2141
    %2144 = vmatprep.subr.mxu0 0.0
    %2145 = vmatpush1.msra.mxu0 0.0
    %2146 = vmatprep.subr.mxu0 0.0
    %2147 = vmatpush1.msra.mxu0 0.0
    %2148 = vmatprep.subr.mxu0 0.0
    %2149 = vmatpush1.msra.mxu0 0.0
    %2150 = vmatprep.subr.mxu0 0.0
    %2151 = vmatpush1.msra.mxu0 0.0
    %2152 = vmatprep.subr.mxu0 0.0
    %2153 = vmatpush1.msra.mxu0 0.0
    %2154 = vmatprep.subr.mxu0 0.0
    %2155 = vmatpush1.msra.mxu0 0.0
    %2156 = vmatprep.subr.mxu0 0.0
    %2157 = vmatpush1.msra.mxu0 0.0
    %2158 = vmatprep.subr.mxu0 0.0
    %2159 = vmatpush1.msra.mxu0 0.0
    %2160 = vmatprep.subr.mxu0 0.0
    %2161 = vmatpush1.msra.mxu0 0.0
    %2162 = vmatprep.subr.mxu0 0.0
    %2163 = vmatpush1.msra.mxu0 0.0
    %2164 = vmatprep.subr.mxu0 0.0
    %2165 = vmatpush1.msra.mxu0 0.0
    %2166 = vmatprep.subr.mxu0 0.0
    %2167 = vmatpush1.msra.mxu0 0.0
    %2168 = vmatprep.subr.mxu0 0.0
    %2169 = vmatpush1.msra.mxu0 0.0
    %2170 = vmatprep.subr.mxu0 0.0
    %2171 = vmatpush1.msra.mxu0 0.0
    %2172 = vmatprep.subr.mxu0 0.0
    %2173 = vmatpush1.msra.mxu0 0.0
    %2174 = vmatprep.subr.mxu0 0.0
    %2175 = vmatpush1.msra.mxu0 %v2142
    %2176 = vmatprep.subr.mxu0 0.0
    %2177 = vmatpush2.msra.mxu0 0.0
    %2178 = vmatprep.subr.mxu0 0.0
    %2179 = vmatpush2.msra.mxu0 0.0
    %2180 = vmatprep.subr.mxu0 0.0
    %2181 = vmatpush2.msra.mxu0 0.0
    %2182 = vmatprep.subr.mxu0 0.0
    %2183 = vmatpush2.msra.mxu0 0.0
    %2184 = vmatprep.subr.mxu0 0.0
    %2185 = vmatpush2.msra.mxu0 0.0
    %2186 = vmatprep.subr.mxu0 0.0
    %2187 = vmatpush2.msra.mxu0 0.0
    %2188 = vmatprep.subr.mxu0 0.0
    %2189 = vmatpush2.msra.mxu0 0.0
    %2190 = vmatprep.subr.mxu0 0.0
    %2191 = vmatpush2.msra.mxu0 0.0
    %2192 = vmatprep.subr.mxu0 0.0
    %2193 = vmatpush2.msra.mxu0 0.0
    %2194 = vmatprep.subr.mxu0 0.0
    %2195 = vmatpush2.msra.mxu0 0.0
    %2196 = vmatprep.subr.mxu0 0.0
    %2197 = vmatpush2.msra.mxu0 0.0
    %2198 = vmatprep.subr.mxu0 0.0
    %2199 = vmatpush2.msra.mxu0 0.0
    %2200 = vmatprep.subr.mxu0 0.0
    %2201 = vmatpush2.msra.mxu0 0.0
    %2202 = vmatprep.subr.mxu0 0.0
    %2203 = vmatpush2.msra.mxu0 0.0
    %2204 = vmatprep.subr.mxu0 0.0
    %2205 = vmatpush2.msra.mxu0 0.0
    %2206 = vmatprep.subr.mxu0 0.0
    %2207 = vmatpush2.msra.mxu0 0.0
    %2208 = vmatprep.mubr.f32.mxu0 0.0
    %2209 = vmatmul.mubr.f32.gmra.mxu0 %v2047
    %v2210 = vpop.f32.mrf.mxu0
    %v2211 = vadd.f32 %v2039, %v2210
    %v2212 = vpop.f32.mrf.mxu0
    %2213 = vdwg.mxu0
    %s2214 = scalar_lea.vmem [#allocation2], 8
    %2215 = vst.msk [vmem:[%s2214] sm:$0xff] %vm45, %v2211
    // Predicated region
    $region46: #{model_forward.1} parent=1 // pred_check
      _
    $region47: #{model_forward.1} parent=1 // pred_check_branch
      %2217 = sbr.rel (0) target = $region49
    $region48: #{model_forward.1} parent=1 // pred_region
      %s2219 = ssub.s32 256, 256
      %2220 = vsyncadd [#allocation3], %s2219
      %s2221 = sshll.u32 [#allocation2], 4
      %s2222 = int_to_ptr.vmem [resolvable:$true] %s2221
      %2227 = dma.vmem_to_hbm [thread:$0]  %s2222, 256, %s11, [#allocation3], 128, 128, 8
    $region49: #{model_forward.1} parent=1 // pred_fallthru
      _
    // Predicated region
    $region50: #{model_forward.1} parent=1 // pred_check
      _
    $region51: #{model_forward.1} parent=1 // pred_check_branch
      %2229 = sbr.rel (0) target = $region53
    $region52: #{model_forward.1} parent=1 // pred_region
      %2230 = dma.done [#allocation3], 256
    $region53: #{model_forward.1} parent=1 // pred_fallthru
      _
    %2231 = vsyncpa [#allocation3], 1

</llo_original>
